<compile_context>
chip_gen: v7x
topology: tpu7x:2x2x1
jax: 0.10.0
libtpu: 0.0.40
codegen_flags: <defaults>
</compile_context>

<pallas_src>
import functools

import jax
import jax.numpy as jnp
from jax import lax
from jax.experimental import pallas as pl
from jax.experimental.pallas import tpu as pltpu


def _round_up(v, m):
    return ((v + m - 1) // m) * m


def _lstm_classifier_kernel(x2d_ref, wih_ref, whh_ref, b_ref,
                            w1_ref, b1_ref, w3_ref, b3_ref,
                            logits_ref, feat_ref,
                            xproj_scr, *, seq_len, b_pad, hidden):
    # ---- 1) input projection for all timesteps in one fat matmul ----------
    # x2d: (T*B_pad, n_in) -> xproj: (T*B_pad, 4*hidden), bias folded in once.
    xproj_scr[...] = (
        jnp.dot(x2d_ref[...], wih_ref[...], preferred_element_type=jnp.float32)
        + b_ref[...]
    )

    whh = whh_ref[...]                                   # hoist weight load

    # ---- 2) sequential LSTM recurrence; h/c live in vregs as loop carries --
    def step(t, carry):
        h, c = carry
        base = pl.multiple_of(t * b_pad, b_pad)          # sublane-aligned start
        gates = xproj_scr[pl.ds(base, b_pad), :] + jnp.dot(
            h, whh, preferred_element_type=jnp.float32)  # (B_pad, 4H)

        # 2 full-slab transcendentals, then static lane slices (i, f, g, o).
        sg = jax.nn.sigmoid(gates)
        th = jnp.tanh(gates)
        i_g = sg[:, 0 * hidden:1 * hidden]
        f_g = sg[:, 1 * hidden:2 * hidden]
        g_g = th[:, 2 * hidden:3 * hidden]
        o_g = sg[:, 3 * hidden:4 * hidden]

        c_new = f_g * c + i_g * g_g
        h_new = o_g * jnp.tanh(c_new)
        return h_new, c_new

    h0 = jnp.zeros((b_pad, hidden), jnp.float32)
    c0 = jnp.zeros((b_pad, hidden), jnp.float32)
    h_last, _ = lax.fori_loop(0, seq_len, step, (h0, c0), unroll=True)

    # ---- 3) head: fc1 + ReLU, then fc3 (lane-padded output) ----------------
    feat = jnp.maximum(
        jnp.dot(h_last, w1_ref[...], preferred_element_type=jnp.float32)
        + b1_ref[...],
        0.0,
    )
    feat_ref[...] = feat.astype(feat_ref.dtype)
    logits_ref[...] = (
        jnp.dot(feat, w3_ref[...], preferred_element_type=jnp.float32)
        + b3_ref[...]
    ).astype(logits_ref.dtype)


def classifier_action_forward(x, params):
    """x: (B, T, n_in) float32.  Returns (logits (B, n_c), feat (B, 128))."""
    B, T, n_in = x.shape
    w_ih, w_hh, b_ih, b_hh, w_fc1, b_fc1, w_fc3, b_fc3 = (
        params["w_ih"], params["w_hh"], params["b_ih"], params["b_hh"],
        params["w_fc1"], params["b_fc1"], params["w_fc3"], params["b_fc3"],
    )
    hidden = w_hh.shape[1]          # PyTorch w_hh: (4*hidden, hidden)
    n_c = w_fc3.shape[0]            # PyTorch fc3.weight: (n_c, 128)

    B_pad = max(8, _round_up(B, 8))         # full sublanes for elementwise math
    n_c_pad = _round_up(n_c, 128)           # lane-dense logits store

    # --- wrapper glue: transpose/pad/reshape so every kernel op is plain ----
    # x -> (T, B_pad, n_in) -> (T*B_pad, n_in)
    x_tbn = jnp.transpose(x, (1, 0, 2))
    x_tbn = jnp.pad(x_tbn, ((0, 0), (0, B_pad - B), (0, 0)))
    x2d = x_tbn.reshape(T * B_pad, n_in)

    wih_t = jnp.transpose(w_ih)                           # (n_in, 4*hidden)
    whh_t = jnp.transpose(w_hh)                           # (hidden, 4*hidden)
    b_comb = (b_ih + b_hh).reshape(1, -1)                 # (1, 4*hidden)
    w1_t = jnp.transpose(w_fc1)                           # (hidden, 128)
    b1 = b_fc1.reshape(1, -1)                             # (1, 128)
    w3_pad = jnp.zeros((128, n_c_pad), jnp.float32).at[:, :n_c].set(
        jnp.transpose(w_fc3))                             # (128, n_c_pad)
    b3_pad = jnp.zeros((1, n_c_pad), jnp.float32).at[:, :n_c].set(
        b_fc3.reshape(1, -1))                             # (1, n_c_pad)

    kernel = functools.partial(
        _lstm_classifier_kernel, seq_len=T, b_pad=B_pad, hidden=hidden)

    logits_pad, feat_pad = pl.pallas_call(
        kernel,
        out_shape=(
            jax.ShapeDtypeStruct((B_pad, n_c_pad), jnp.float32),
            jax.ShapeDtypeStruct((B_pad, 128), jnp.float32),
        ),
        scratch_shapes=[
            pltpu.VMEM((T * B_pad, 4 * hidden), jnp.float32),  # x projection
        ],
    )(x2d, wih_t, whh_t, b_comb, w1_t, b1, w3_pad, b3_pad)

    return logits_pad[:B, :n_c], feat_pad[:B, :]


def init_params(key, n_in, n_c, dim):
    """Deterministic init matching the PyTorch module's parameter shapes."""
    ks = jax.random.split(key, 8)
    s_lstm = 1.0 / jnp.sqrt(dim)
    s_fc1 = 1.0 / jnp.sqrt(dim)
    s_fc3 = 1.0 / jnp.sqrt(128.0)
    u = lambda k, shape, s: jax.random.uniform(k, shape, jnp.float32, -s, s)
    return {
        "w_ih": u(ks[0], (4 * dim, n_in), s_lstm),
        "w_hh": u(ks[1], (4 * dim, dim), s_lstm),
        "b_ih": u(ks[2], (4 * dim,), s_lstm),
        "b_hh": u(ks[3], (4 * dim,), s_lstm),
        "w_fc1": u(ks[4], (128, dim), s_fc1),
        "b_fc1": u(ks[5], (128,), s_fc1),
        "w_fc3": u(ks[6], (n_c, 128), s_fc3),
        "b_fc3": u(ks[7], (n_c,), s_fc3),
    }


def reference_forward(x, params):
    """Pure-JAX reference (lax.scan LSTM) for correctness checking."""
    B, T, n_in = x.shape
    dim = params["w_hh"].shape[1]
    wih_t = params["w_ih"].T
    whh_t = params["w_hh"].T
    b = params["b_ih"] + params["b_hh"]

    def step(carry, x_t):
        h, c = carry
        gates = x_t @ wih_t + h @ whh_t + b
        i = jax.nn.sigmoid(gates[:, 0 * dim:1 * dim])
        f = jax.nn.sigmoid(gates[:, 1 * dim:2 * dim])
        g = jnp.tanh(gates[:, 2 * dim:3 * dim])
        o = jax.nn.sigmoid(gates[:, 3 * dim:4 * dim])
        c = f * c + i * g
        h = o * jnp.tanh(c)
        return (h, c), h

    (h_last, _), _ = jax.lax.scan(
        step,
        (jnp.zeros((B, dim), jnp.float32), jnp.zeros((B, dim), jnp.float32)),
        jnp.transpose(x, (1, 0, 2)),
    )
    feat = jnp.maximum(h_last @ params["w_fc1"].T + params["b_fc1"], 0.0)
    logits = feat @ params["w_fc3"].T + params["b_fc3"]
    return logits, feat


if __name__ == "__main__":
    # Small shapes consistent with the module's forward:
    B, T, n_in, dim, n_c = 2, 8, 16, 32, 10
    key = jax.random.PRNGKey(0)
    kx, kp = jax.random.split(key)
    x = jax.random.normal(kx, (B, T, n_in), jnp.float32)
    params = init_params(kp, n_in, n_c, dim)

    logits, feat = classifier_action_forward(x, params)
    jax.block_until_ready((logits, feat))

    ref_logits, ref_feat = reference_forward(x, params)
    assert logits.shape == (B, n_c) and feat.shape == (B, 128)
    assert jnp.allclose(logits, ref_logits, atol=1e-4, rtol=1e-4)
    assert jnp.allclose(feat, ref_feat, atol=1e-4, rtol=1e-4)

    print("KERNEL_OK")
</pallas_src>

<mosaic_0001>
module attributes {stable_mosaic.version = 11 : i64} {
  func.func @_lstm_classifier_kernel(%arg0: memref<64x16xf32, #tpu.memory_space<vmem>>, %arg1: memref<16x128xf32, #tpu.memory_space<vmem>>, %arg2: memref<32x128xf32, #tpu.memory_space<vmem>>, %arg3: memref<1x128xf32, #tpu.memory_space<vmem>>, %arg4: memref<32x128xf32, #tpu.memory_space<vmem>>, %arg5: memref<1x128xf32, #tpu.memory_space<vmem>>, %arg6: memref<128x128xf32, #tpu.memory_space<vmem>>, %arg7: memref<1x128xf32, #tpu.memory_space<vmem>>, %arg8: memref<8x128xf32, #tpu.memory_space<vmem>>, %arg9: memref<8x128xf32, #tpu.memory_space<vmem>>, %arg10: memref<64x128xf32, #tpu.memory_space<vmem>>) attributes {dimension_semantics = [], scalar_prefetch = 0 : i64, scratch_operands = 1 : i64, tpu.core_type = #tpu.core_type<tc>} {
    %c0 = arith.constant 0 : index
    %c0_0 = arith.constant 0 : index
    %0 = vector.load %arg0[%c0, %c0_0] : memref<64x16xf32, #tpu.memory_space<vmem>>, vector<64x16xf32>
    %c0_1 = arith.constant 0 : index
    %c0_2 = arith.constant 0 : index
    %1 = vector.load %arg1[%c0_1, %c0_2] : memref<16x128xf32, #tpu.memory_space<vmem>>, vector<16x128xf32>
    %cst = arith.constant dense<0.000000e+00> : vector<64x128xf32>
    %2 = tpu.matmul %0, %1, %cst {dimension_numbers = #tpu.dot_dimension_numbers<[1], [0], [0], [1], [0, 0, 1, 1], [], []>} : vector<64x16xf32>, vector<16x128xf32>, vector<64x128xf32> -> vector<64x128xf32>
    %c0_3 = arith.constant 0 : index
    %c0_4 = arith.constant 0 : index
    %3 = vector.load %arg3[%c0_3, %c0_4] : memref<1x128xf32, #tpu.memory_space<vmem>>, vector<1x128xf32>
    %4 = vector.broadcast %3 : vector<1x128xf32> to vector<64x128xf32>
    %5 = arith.addf %2, %4 : vector<64x128xf32>
    %c0_5 = arith.constant 0 : index
    %c0_6 = arith.constant 0 : index
    %6 = vector.load %arg10[%c0_5, %c0_6] : memref<64x128xf32, #tpu.memory_space<vmem>>, vector<64x128xf32>
    tpu.vector_store %arg10[%c0_5, %c0_6], %5 {strides = array<i32>} : memref<64x128xf32, #tpu.memory_space<vmem>>, vector<64x128xf32>,
    %c0_7 = arith.constant 0 : index
    %c0_8 = arith.constant 0 : index
    %7 = vector.load %arg2[%c0_7, %c0_8] : memref<32x128xf32, #tpu.memory_space<vmem>>, vector<32x128xf32>
    %cst_9 = arith.constant 0.000000e+00 : f32
    %8 = vector.broadcast %cst_9 : f32 to vector<8x32xf32>
    %cst_10 = arith.constant 0.000000e+00 : f32
    %9 = vector.broadcast %cst_10 : f32 to vector<8x32xf32>
    %c0_i32 = arith.constant 0 : i32
    %c8_i32 = arith.constant 8 : i32
    %10 = arith.muli %c0_i32, %c8_i32 : i32
    %11 = tpu.assume_multiple %10, 8 : i32
    %12 = arith.index_cast %11 : i32 to index
    %c0_11 = arith.constant 0 : index
    %13 = vector.load %arg10[%12, %c0_11] : memref<64x128xf32, #tpu.memory_space<vmem>>, vector<8x128xf32>
    %cst_12 = arith.constant dense<0.000000e+00> : vector<8x128xf32>
    %14 = tpu.matmul %8, %7, %cst_12 {dimension_numbers = #tpu.dot_dimension_numbers<[1], [0], [0], [1], [0, 0, 1, 1], [], []>} : vector<8x32xf32>, vector<32x128xf32>, vector<8x128xf32> -> vector<8x128xf32>
    %15 = arith.addf %13, %14 : vector<8x128xf32>
    %16 = arith.negf %15 : vector<8x128xf32>
    %17 = math.exp %16 : vector<8x128xf32>
    %cst_13 = arith.constant 1.000000e+00 : f32
    %18 = vector.broadcast %cst_13 : f32 to vector<8x128xf32>
    %19 = arith.addf %18, %17 : vector<8x128xf32>
    %20 = arith.divf %18, %19 : vector<8x128xf32>
    %21 = math.tanh %15 : vector<8x128xf32>
    %22 = vector.extract_strided_slice %20 {offsets = [0, 0], sizes = [8, 32], strides = [1, 1]} : vector<8x128xf32> to vector<8x32xf32>
    %23 = vector.extract_strided_slice %20 {offsets = [0, 32], sizes = [8, 32], strides = [1, 1]} : vector<8x128xf32> to vector<8x32xf32>
    %24 = vector.extract_strided_slice %21 {offsets = [0, 64], sizes = [8, 32], strides = [1, 1]} : vector<8x128xf32> to vector<8x32xf32>
    %25 = vector.extract_strided_slice %20 {offsets = [0, 96], sizes = [8, 32], strides = [1, 1]} : vector<8x128xf32> to vector<8x32xf32>
    %26 = arith.mulf %23, %9 : vector<8x32xf32>
    %27 = arith.mulf %22, %24 : vector<8x32xf32>
    %28 = arith.addf %26, %27 : vector<8x32xf32>
    %29 = math.tanh %28 : vector<8x32xf32>
    %30 = arith.mulf %25, %29 : vector<8x32xf32>
    %c1_i32 = arith.constant 1 : i32
    %c8_i32_14 = arith.constant 8 : i32
    %31 = arith.muli %c1_i32, %c8_i32_14 : i32
    %32 = tpu.assume_multiple %31, 8 : i32
    %33 = arith.index_cast %32 : i32 to index
    %c0_15 = arith.constant 0 : index
    %34 = vector.load %arg10[%33, %c0_15] : memref<64x128xf32, #tpu.memory_space<vmem>>, vector<8x128xf32>
    %cst_16 = arith.constant dense<0.000000e+00> : vector<8x128xf32>
    %35 = tpu.matmul %30, %7, %cst_16 {dimension_numbers = #tpu.dot_dimension_numbers<[1], [0], [0], [1], [0, 0, 1, 1], [], []>} : vector<8x32xf32>, vector<32x128xf32>, vector<8x128xf32> -> vector<8x128xf32>
    %36 = arith.addf %34, %35 : vector<8x128xf32>
    %37 = arith.negf %36 : vector<8x128xf32>
    %38 = math.exp %37 : vector<8x128xf32>
    %cst_17 = arith.constant 1.000000e+00 : f32
    %39 = vector.broadcast %cst_17 : f32 to vector<8x128xf32>
    %40 = arith.addf %39, %38 : vector<8x128xf32>
    %41 = arith.divf %39, %40 : vector<8x128xf32>
    %42 = math.tanh %36 : vector<8x128xf32>
    %43 = vector.extract_strided_slice %41 {offsets = [0, 0], sizes = [8, 32], strides = [1, 1]} : vector<8x128xf32> to vector<8x32xf32>
    %44 = vector.extract_strided_slice %41 {offsets = [0, 32], sizes = [8, 32], strides = [1, 1]} : vector<8x128xf32> to vector<8x32xf32>
    %45 = vector.extract_strided_slice %42 {offsets = [0, 64], sizes = [8, 32], strides = [1, 1]} : vector<8x128xf32> to vector<8x32xf32>
    %46 = vector.extract_strided_slice %41 {offsets = [0, 96], sizes = [8, 32], strides = [1, 1]} : vector<8x128xf32> to vector<8x32xf32>
    %47 = arith.mulf %44, %28 : vector<8x32xf32>
    %48 = arith.mulf %43, %45 : vector<8x32xf32>
    %49 = arith.addf %47, %48 : vector<8x32xf32>
    %50 = math.tanh %49 : vector<8x32xf32>
    %51 = arith.mulf %46, %50 : vector<8x32xf32>
    %c2_i32 = arith.constant 2 : i32
    %c8_i32_18 = arith.constant 8 : i32
    %52 = arith.muli %c2_i32, %c8_i32_18 : i32
    %53 = tpu.assume_multiple %52, 8 : i32
    %54 = arith.index_cast %53 : i32 to index
    %c0_19 = arith.constant 0 : index
    %55 = vector.load %arg10[%54, %c0_19] : memref<64x128xf32, #tpu.memory_space<vmem>>, vector<8x128xf32>
    %cst_20 = arith.constant dense<0.000000e+00> : vector<8x128xf32>
    %56 = tpu.matmul %51, %7, %cst_20 {dimension_numbers = #tpu.dot_dimension_numbers<[1], [0], [0], [1], [0, 0, 1, 1], [], []>} : vector<8x32xf32>, vector<32x128xf32>, vector<8x128xf32> -> vector<8x128xf32>
    %57 = arith.addf %55, %56 : vector<8x128xf32>
    %58 = arith.negf %57 : vector<8x128xf32>
    %59 = math.exp %58 : vector<8x128xf32>
    %cst_21 = arith.constant 1.000000e+00 : f32
    %60 = vector.broadcast %cst_21 : f32 to vector<8x128xf32>
    %61 = arith.addf %60, %59 : vector<8x128xf32>
    %62 = arith.divf %60, %61 : vector<8x128xf32>
    %63 = math.tanh %57 : vector<8x128xf32>
    %64 = vector.extract_strided_slice %62 {offsets = [0, 0], sizes = [8, 32], strides = [1, 1]} : vector<8x128xf32> to vector<8x32xf32>
    %65 = vector.extract_strided_slice %62 {offsets = [0, 32], sizes = [8, 32], strides = [1, 1]} : vector<8x128xf32> to vector<8x32xf32>
    %66 = vector.extract_strided_slice %63 {offsets = [0, 64], sizes = [8, 32], strides = [1, 1]} : vector<8x128xf32> to vector<8x32xf32>
    %67 = vector.extract_strided_slice %62 {offsets = [0, 96], sizes = [8, 32], strides = [1, 1]} : vector<8x128xf32> to vector<8x32xf32>
    %68 = arith.mulf %65, %49 : vector<8x32xf32>
    %69 = arith.mulf %64, %66 : vector<8x32xf32>
    %70 = arith.addf %68, %69 : vector<8x32xf32>
    %71 = math.tanh %70 : vector<8x32xf32>
    %72 = arith.mulf %67, %71 : vector<8x32xf32>
    %c3_i32 = arith.constant 3 : i32
    %c8_i32_22 = arith.constant 8 : i32
    %73 = arith.muli %c3_i32, %c8_i32_22 : i32
    %74 = tpu.assume_multiple %73, 8 : i32
    %75 = arith.index_cast %74 : i32 to index
    %c0_23 = arith.constant 0 : index
    %76 = vector.load %arg10[%75, %c0_23] : memref<64x128xf32, #tpu.memory_space<vmem>>, vector<8x128xf32>
    %cst_24 = arith.constant dense<0.000000e+00> : vector<8x128xf32>
    %77 = tpu.matmul %72, %7, %cst_24 {dimension_numbers = #tpu.dot_dimension_numbers<[1], [0], [0], [1], [0, 0, 1, 1], [], []>} : vector<8x32xf32>, vector<32x128xf32>, vector<8x128xf32> -> vector<8x128xf32>
    %78 = arith.addf %76, %77 : vector<8x128xf32>
    %79 = arith.negf %78 : vector<8x128xf32>
    %80 = math.exp %79 : vector<8x128xf32>
    %cst_25 = arith.constant 1.000000e+00 : f32
    %81 = vector.broadcast %cst_25 : f32 to vector<8x128xf32>
    %82 = arith.addf %81, %80 : vector<8x128xf32>
    %83 = arith.divf %81, %82 : vector<8x128xf32>
    %84 = math.tanh %78 : vector<8x128xf32>
    %85 = vector.extract_strided_slice %83 {offsets = [0, 0], sizes = [8, 32], strides = [1, 1]} : vector<8x128xf32> to vector<8x32xf32>
    %86 = vector.extract_strided_slice %83 {offsets = [0, 32], sizes = [8, 32], strides = [1, 1]} : vector<8x128xf32> to vector<8x32xf32>
    %87 = vector.extract_strided_slice %84 {offsets = [0, 64], sizes = [8, 32], strides = [1, 1]} : vector<8x128xf32> to vector<8x32xf32>
    %88 = vector.extract_strided_slice %83 {offsets = [0, 96], sizes = [8, 32], strides = [1, 1]} : vector<8x128xf32> to vector<8x32xf32>
    %89 = arith.mulf %86, %70 : vector<8x32xf32>
    %90 = arith.mulf %85, %87 : vector<8x32xf32>
    %91 = arith.addf %89, %90 : vector<8x32xf32>
    %92 = math.tanh %91 : vector<8x32xf32>
    %93 = arith.mulf %88, %92 : vector<8x32xf32>
    %c4_i32 = arith.constant 4 : i32
    %c8_i32_26 = arith.constant 8 : i32
    %94 = arith.muli %c4_i32, %c8_i32_26 : i32
    %95 = tpu.assume_multiple %94, 8 : i32
    %96 = arith.index_cast %95 : i32 to index
    %c0_27 = arith.constant 0 : index
    %97 = vector.load %arg10[%96, %c0_27] : memref<64x128xf32, #tpu.memory_space<vmem>>, vector<8x128xf32>
    %cst_28 = arith.constant dense<0.000000e+00> : vector<8x128xf32>
    %98 = tpu.matmul %93, %7, %cst_28 {dimension_numbers = #tpu.dot_dimension_numbers<[1], [0], [0], [1], [0, 0, 1, 1], [], []>} : vector<8x32xf32>, vector<32x128xf32>, vector<8x128xf32> -> vector<8x128xf32>
    %99 = arith.addf %97, %98 : vector<8x128xf32>
    %100 = arith.negf %99 : vector<8x128xf32>
    %101 = math.exp %100 : vector<8x128xf32>
    %cst_29 = arith.constant 1.000000e+00 : f32
    %102 = vector.broadcast %cst_29 : f32 to vector<8x128xf32>
    %103 = arith.addf %102, %101 : vector<8x128xf32>
    %104 = arith.divf %102, %103 : vector<8x128xf32>
    %105 = math.tanh %99 : vector<8x128xf32>
    %106 = vector.extract_strided_slice %104 {offsets = [0, 0], sizes = [8, 32], strides = [1, 1]} : vector<8x128xf32> to vector<8x32xf32>
    %107 = vector.extract_strided_slice %104 {offsets = [0, 32], sizes = [8, 32], strides = [1, 1]} : vector<8x128xf32> to vector<8x32xf32>
    %108 = vector.extract_strided_slice %105 {offsets = [0, 64], sizes = [8, 32], strides = [1, 1]} : vector<8x128xf32> to vector<8x32xf32>
    %109 = vector.extract_strided_slice %104 {offsets = [0, 96], sizes = [8, 32], strides = [1, 1]} : vector<8x128xf32> to vector<8x32xf32>
    %110 = arith.mulf %107, %91 : vector<8x32xf32>
    %111 = arith.mulf %106, %108 : vector<8x32xf32>
    %112 = arith.addf %110, %111 : vector<8x32xf32>
    %113 = math.tanh %112 : vector<8x32xf32>
    %114 = arith.mulf %109, %113 : vector<8x32xf32>
    %c5_i32 = arith.constant 5 : i32
    %c8_i32_30 = arith.constant 8 : i32
    %115 = arith.muli %c5_i32, %c8_i32_30 : i32
    %116 = tpu.assume_multiple %115, 8 : i32
    %117 = arith.index_cast %116 : i32 to index
    %c0_31 = arith.constant 0 : index
    %118 = vector.load %arg10[%117, %c0_31] : memref<64x128xf32, #tpu.memory_space<vmem>>, vector<8x128xf32>
    %cst_32 = arith.constant dense<0.000000e+00> : vector<8x128xf32>
    %119 = tpu.matmul %114, %7, %cst_32 {dimension_numbers = #tpu.dot_dimension_numbers<[1], [0], [0], [1], [0, 0, 1, 1], [], []>} : vector<8x32xf32>, vector<32x128xf32>, vector<8x128xf32> -> vector<8x128xf32>
    %120 = arith.addf %118, %119 : vector<8x128xf32>
    %121 = arith.negf %120 : vector<8x128xf32>
    %122 = math.exp %121 : vector<8x128xf32>
    %cst_33 = arith.constant 1.000000e+00 : f32
    %123 = vector.broadcast %cst_33 : f32 to vector<8x128xf32>
    %124 = arith.addf %123, %122 : vector<8x128xf32>
    %125 = arith.divf %123, %124 : vector<8x128xf32>
    %126 = math.tanh %120 : vector<8x128xf32>
    %127 = vector.extract_strided_slice %125 {offsets = [0, 0], sizes = [8, 32], strides = [1, 1]} : vector<8x128xf32> to vector<8x32xf32>
    %128 = vector.extract_strided_slice %125 {offsets = [0, 32], sizes = [8, 32], strides = [1, 1]} : vector<8x128xf32> to vector<8x32xf32>
    %129 = vector.extract_strided_slice %126 {offsets = [0, 64], sizes = [8, 32], strides = [1, 1]} : vector<8x128xf32> to vector<8x32xf32>
    %130 = vector.extract_strided_slice %125 {offsets = [0, 96], sizes = [8, 32], strides = [1, 1]} : vector<8x128xf32> to vector<8x32xf32>
    %131 = arith.mulf %128, %112 : vector<8x32xf32>
    %132 = arith.mulf %127, %129 : vector<8x32xf32>
    %133 = arith.addf %131, %132 : vector<8x32xf32>
    %134 = math.tanh %133 : vector<8x32xf32>
    %135 = arith.mulf %130, %134 : vector<8x32xf32>
    %c6_i32 = arith.constant 6 : i32
    %c8_i32_34 = arith.constant 8 : i32
    %136 = arith.muli %c6_i32, %c8_i32_34 : i32
    %137 = tpu.assume_multiple %136, 8 : i32
    %138 = arith.index_cast %137 : i32 to index
    %c0_35 = arith.constant 0 : index
    %139 = vector.load %arg10[%138, %c0_35] : memref<64x128xf32, #tpu.memory_space<vmem>>, vector<8x128xf32>
    %cst_36 = arith.constant dense<0.000000e+00> : vector<8x128xf32>
    %140 = tpu.matmul %135, %7, %cst_36 {dimension_numbers = #tpu.dot_dimension_numbers<[1], [0], [0], [1], [0, 0, 1, 1], [], []>} : vector<8x32xf32>, vector<32x128xf32>, vector<8x128xf32> -> vector<8x128xf32>
    %141 = arith.addf %139, %140 : vector<8x128xf32>
    %142 = arith.negf %141 : vector<8x128xf32>
    %143 = math.exp %142 : vector<8x128xf32>
    %cst_37 = arith.constant 1.000000e+00 : f32
    %144 = vector.broadcast %cst_37 : f32 to vector<8x128xf32>
    %145 = arith.addf %144, %143 : vector<8x128xf32>
    %146 = arith.divf %144, %145 : vector<8x128xf32>
    %147 = math.tanh %141 : vector<8x128xf32>
    %148 = vector.extract_strided_slice %146 {offsets = [0, 0], sizes = [8, 32], strides = [1, 1]} : vector<8x128xf32> to vector<8x32xf32>
    %149 = vector.extract_strided_slice %146 {offsets = [0, 32], sizes = [8, 32], strides = [1, 1]} : vector<8x128xf32> to vector<8x32xf32>
    %150 = vector.extract_strided_slice %147 {offsets = [0, 64], sizes = [8, 32], strides = [1, 1]} : vector<8x128xf32> to vector<8x32xf32>
    %151 = vector.extract_strided_slice %146 {offsets = [0, 96], sizes = [8, 32], strides = [1, 1]} : vector<8x128xf32> to vector<8x32xf32>
    %152 = arith.mulf %149, %133 : vector<8x32xf32>
    %153 = arith.mulf %148, %150 : vector<8x32xf32>
    %154 = arith.addf %152, %153 : vector<8x32xf32>
    %155 = math.tanh %154 : vector<8x32xf32>
    %156 = arith.mulf %151, %155 : vector<8x32xf32>
    %c7_i32 = arith.constant 7 : i32
    %c8_i32_38 = arith.constant 8 : i32
    %157 = arith.muli %c7_i32, %c8_i32_38 : i32
    %158 = tpu.assume_multiple %157, 8 : i32
    %159 = arith.index_cast %158 : i32 to index
    %c0_39 = arith.constant 0 : index
    %160 = vector.load %arg10[%159, %c0_39] : memref<64x128xf32, #tpu.memory_space<vmem>>, vector<8x128xf32>
    %cst_40 = arith.constant dense<0.000000e+00> : vector<8x128xf32>
    %161 = tpu.matmul %156, %7, %cst_40 {dimension_numbers = #tpu.dot_dimension_numbers<[1], [0], [0], [1], [0, 0, 1, 1], [], []>} : vector<8x32xf32>, vector<32x128xf32>, vector<8x128xf32> -> vector<8x128xf32>
    %162 = arith.addf %160, %161 : vector<8x128xf32>
    %163 = arith.negf %162 : vector<8x128xf32>
    %164 = math.exp %163 : vector<8x128xf32>
    %cst_41 = arith.constant 1.000000e+00 : f32
    %165 = vector.broadcast %cst_41 : f32 to vector<8x128xf32>
    %166 = arith.addf %165, %164 : vector<8x128xf32>
    %167 = arith.divf %165, %166 : vector<8x128xf32>
    %168 = math.tanh %162 : vector<8x128xf32>
    %169 = vector.extract_strided_slice %167 {offsets = [0, 0], sizes = [8, 32], strides = [1, 1]} : vector<8x128xf32> to vector<8x32xf32>
    %170 = vector.extract_strided_slice %167 {offsets = [0, 32], sizes = [8, 32], strides = [1, 1]} : vector<8x128xf32> to vector<8x32xf32>
    %171 = vector.extract_strided_slice %168 {offsets = [0, 64], sizes = [8, 32], strides = [1, 1]} : vector<8x128xf32> to vector<8x32xf32>
    %172 = vector.extract_strided_slice %167 {offsets = [0, 96], sizes = [8, 32], strides = [1, 1]} : vector<8x128xf32> to vector<8x32xf32>
    %173 = arith.mulf %170, %154 : vector<8x32xf32>
    %174 = arith.mulf %169, %171 : vector<8x32xf32>
    %175 = arith.addf %173, %174 : vector<8x32xf32>
    %176 = math.tanh %175 : vector<8x32xf32>
    %177 = arith.mulf %172, %176 : vector<8x32xf32>
    %c8_i32_42 = arith.constant 8 : i32
    %c0_43 = arith.constant 0 : index
    %c0_44 = arith.constant 0 : index
    %178 = vector.load %arg4[%c0_43, %c0_44] : memref<32x128xf32, #tpu.memory_space<vmem>>, vector<32x128xf32>
    %cst_45 = arith.constant dense<0.000000e+00> : vector<8x128xf32>
    %179 = tpu.matmul %177, %178, %cst_45 {dimension_numbers = #tpu.dot_dimension_numbers<[1], [0], [0], [1], [0, 0, 1, 1], [], []>} : vector<8x32xf32>, vector<32x128xf32>, vector<8x128xf32> -> vector<8x128xf32>
    %c0_46 = arith.constant 0 : index
    %c0_47 = arith.constant 0 : index
    %180 = vector.load %arg5[%c0_46, %c0_47] : memref<1x128xf32, #tpu.memory_space<vmem>>, vector<1x128xf32>
    %181 = vector.broadcast %180 : vector<1x128xf32> to vector<8x128xf32>
    %182 = arith.addf %179, %181 : vector<8x128xf32>
    %cst_48 = arith.constant 0.000000e+00 : f32
    %183 = vector.broadcast %cst_48 : f32 to vector<8x128xf32>
    %184 = arith.maximumf %182, %183 : vector<8x128xf32>
    %c0_49 = arith.constant 0 : index
    %c0_50 = arith.constant 0 : index
    %185 = vector.load %arg9[%c0_49, %c0_50] : memref<8x128xf32, #tpu.memory_space<vmem>>, vector<8x128xf32>
    tpu.vector_store %arg9[%c0_49, %c0_50], %184 {strides = array<i32>} : memref<8x128xf32, #tpu.memory_space<vmem>>, vector<8x128xf32>,
    %c0_51 = arith.constant 0 : index
    %c0_52 = arith.constant 0 : index
    %186 = vector.load %arg6[%c0_51, %c0_52] : memref<128x128xf32, #tpu.memory_space<vmem>>, vector<128x128xf32>
    %cst_53 = arith.constant dense<0.000000e+00> : vector<8x128xf32>
    %187 = tpu.matmul %184, %186, %cst_53 {dimension_numbers = #tpu.dot_dimension_numbers<[1], [0], [0], [1], [0, 0, 1, 1], [], []>} : vector<8x128xf32>, vector<128x128xf32>, vector<8x128xf32> -> vector<8x128xf32>
    %c0_54 = arith.constant 0 : index
    %c0_55 = arith.constant 0 : index
    %188 = vector.load %arg7[%c0_54, %c0_55] : memref<1x128xf32, #tpu.memory_space<vmem>>, vector<1x128xf32>
    %189 = vector.broadcast %188 : vector<1x128xf32> to vector<8x128xf32>
    %190 = arith.addf %187, %189 : vector<8x128xf32>
    %c0_56 = arith.constant 0 : index
    %c0_57 = arith.constant 0 : index
    %191 = vector.load %arg8[%c0_56, %c0_57] : memref<8x128xf32, #tpu.memory_space<vmem>>, vector<8x128xf32>
    tpu.vector_store %arg8[%c0_56, %c0_57], %190 {strides = array<i32>} : memref<8x128xf32, #tpu.memory_space<vmem>>, vector<8x128xf32>,
    return
  }
}

</mosaic_0001>

<llo_original>
// kernel: tpu_custom_call.1
$region0: #{tpu_custom_call.1}
  #allocation0 [shape = 'u32[]', space=smem, size = 0x4, offset = 0x4, fixed_abs, tag = 'smem constant byte address 0x4 - core index']
  #allocation1 [shape = 'u32[144,128]{1,0:T(1,128)}', space=vmem, size = 0x12000, scoped, tag = 'internal scratch']
  #allocation2 [shape = 'f32[64,128]{1,0:T(8,128)}', space=vmem, size = 0x8000, scoped, tag = 'scratch operand']
  %s0 = inlined_call_operand.vmem [shape: f32[64,16], index: 0, kind: input, shape index: {}]
  %s1 = inlined_call_operand.vmem [shape: f32[16,128], index: 1, kind: input, shape index: {}]
  %s2 = inlined_call_operand.vmem [shape: f32[32,128], index: 2, kind: input, shape index: {}]
  %s3 = inlined_call_operand.vmem [shape: f32[1,128], index: 3, kind: input, shape index: {}]
  %s4 = inlined_call_operand.vmem [shape: f32[32,128], index: 4, kind: input, shape index: {}]
  %s5 = inlined_call_operand.vmem [shape: f32[1,128], index: 5, kind: input, shape index: {}]
  %s6 = inlined_call_operand.hbm [shape: f32[128,128], index: 6, kind: input, shape index: {}]
  %s7 = inlined_call_operand.vmem [shape: f32[1,128], index: 7, kind: input, shape index: {}]
  %s8 = inlined_call_operand.hbm [shape: f32[8,128], index: 8, kind: output, shape index: {0}]
  %s9 = inlined_call_operand.hbm [shape: f32[8,128], index: 9, kind: output, shape index: {1}]
  %10 = xla_tuple %s8, %s9
  %s11 = sld [smem:[#allocation0]]
  $region54: #{tpu_custom_call.1} parent=0
    _
  %s13 = ssub.s32 1, %s11
  %s14 = scalar_select 0, %s13, %s11
  $region1: #{tpu_custom_call.1} parent=0
    #allocation3 [shape = 'u8[65536]{0}', space=vmem, size = 0x10000, scoped, tag = 'input window, operand 6, single buffered']
    #allocation4 [shape = 's32[1]{0}', space=sflag, size = 0x4, scoped, tag = 'scoped memory for tpu_custom_call.1']
    #allocation5 [shape = 's32[1]{0}', space=sflag, size = 0x4, scoped, tag = 'scoped memory for tpu_custom_call.1']
    #allocation6 [shape = 'u8[4096]{0}', space=vmem, size = 0x1000, scoped, tag = 'output window, operand 0, single buffered']
    #allocation7 [shape = 'u8[4096]{0}', space=vmem, size = 0x1000, scoped, tag = 'output window, operand 1, single buffered']
    #allocation8 [shape = 's32[1]{0}', space=sflag, size = 0x4, scoped, tag = 'scoped memory for tpu_custom_call.1']
    %15 = vsyncpa [#allocation4], 0
    %16 = vsyncpa [#allocation5], 0
    %17 = vsyncpa [#allocation8], 0
    // Predicated region
    $region2: #{tpu_custom_call.1} parent=1 // pred_check
      _
    $region3: #{tpu_custom_call.1} parent=1 // pred_check_branch
      %19 = sbr.rel (0) target = $region5
    $region4: #{tpu_custom_call.1} parent=1 // pred_region
      _
    $region5: #{tpu_custom_call.1} parent=1 // pred_fallthru
      _
    // Predicated region
    $region6: #{tpu_custom_call.1} parent=1 // pred_check
      _
    $region7: #{tpu_custom_call.1} parent=1 // pred_check_branch
      %21 = sbr.rel (0) target = $region9
    $region8: #{tpu_custom_call.1} parent=1 // pred_region
      _
    $region9: #{tpu_custom_call.1} parent=1 // pred_fallthru
      _
    // Predicated region
    $region10: #{tpu_custom_call.1} parent=1 // pred_check
      _
    $region11: #{tpu_custom_call.1} parent=1 // pred_check_branch
      %23 = sbr.rel (0) target = $region13
    $region12: #{tpu_custom_call.1} parent=1 // pred_region
      _
    $region13: #{tpu_custom_call.1} parent=1 // pred_fallthru
      _
    // Predicated region
    $region14: #{tpu_custom_call.1} parent=1 // pred_check
      _
    $region15: #{tpu_custom_call.1} parent=1 // pred_check_branch
      %25 = sbr.rel (0) target = $region17
    $region16: #{tpu_custom_call.1} parent=1 // pred_region
      _
    $region17: #{tpu_custom_call.1} parent=1 // pred_fallthru
      _
    // Predicated region
    $region18: #{tpu_custom_call.1} parent=1 // pred_check
      _
    $region19: #{tpu_custom_call.1} parent=1 // pred_check_branch
      %27 = sbr.rel (0) target = $region21
    $region20: #{tpu_custom_call.1} parent=1 // pred_region
      _
    $region21: #{tpu_custom_call.1} parent=1 // pred_fallthru
      _
    // Predicated region
    $region22: #{tpu_custom_call.1} parent=1 // pred_check
      _
    $region23: #{tpu_custom_call.1} parent=1 // pred_check_branch
      %29 = sbr.rel (0) target = $region25
    $region24: #{tpu_custom_call.1} parent=1 // pred_region
      _
    $region25: #{tpu_custom_call.1} parent=1 // pred_fallthru
      _
    // Predicated region
    $region26: #{tpu_custom_call.1} parent=1 // pred_check
      _
    $region27: #{tpu_custom_call.1} parent=1 // pred_check_branch
      %31 = sbr.rel (0) target = $region29
    $region28: #{tpu_custom_call.1} parent=1 // pred_region
      %s33 = ssub.s32 2048, 2048
      %34 = vsyncadd [#allocation4], %s33
      %s35 = sshll.u32 [#allocation3], 4
      %s36 = int_to_ptr.vmem [resolvable:$true] %s35
      %41 = dma.hbm_to_vmem [thread:$0]  %s6, 2048, %s36, [#allocation4], 128, 128, 8
    $region29: #{tpu_custom_call.1} parent=1 // pred_fallthru
      _
    // Predicated region
    $region30: #{tpu_custom_call.1} parent=1 // pred_check
      _
    $region31: #{tpu_custom_call.1} parent=1 // pred_check_branch
      %43 = sbr.rel (0) target = $region33
    $region32: #{tpu_custom_call.1} parent=1 // pred_region
      _
    $region33: #{tpu_custom_call.1} parent=1 // pred_fallthru
      _
    // Predicated region
    $region34: #{tpu_custom_call.1} parent=1 // pred_check
      _
    $region35: #{tpu_custom_call.1} parent=1 // pred_check_branch
      %45 = sbr.rel (0) target = $region37
    $region36: #{tpu_custom_call.1} parent=1 // pred_region
      %46 = dma.done [#allocation4], 2048
    $region37: #{tpu_custom_call.1} parent=1 // pred_fallthru
      _
    %v47 = vld [vmem:[%s0] sm:$0xff]
    %v48 = vld [vmem:[%s0 + $0x8] sm:$0xff]
    %v49 = vld [vmem:[%s0 + $0x10] sm:$0xff]
    %v50 = vld [vmem:[%s0 + $0x18] sm:$0xff]
    %v51 = vld [vmem:[%s0 + $0x20] sm:$0xff]
    %v52 = vld [vmem:[%s0 + $0x28] sm:$0xff]
    %v53 = vld [vmem:[%s0 + $0x30] sm:$0xff]
    %v54 = vld [vmem:[%s0 + $0x38] sm:$0xff]
    %v55 = vld [vmem:[%s1] sm:$0xff]
    %v56 = vld [vmem:[%s1 + $0x8] sm:$0xff]
    %v57 = vld [vmem:[%s3] sm:$0x1]
    %v59 = vlaneseq
    %v60 = vshrl.u32 %v59, 7
    %v61 = vsub.s32 0, %v60
    %v62 = vrot.slane %v57, %v61
    %vm64 = vcmask 130048
    %v66 = vsel %vm64, %v47, 0
    %v69 = vsel %vm64, %v48, 0
    %v72 = vsel %vm64, %v49, 0
    %v75 = vsel %vm64, %v50, 0
    %v78 = vsel %vm64, %v51, 0
    %v81 = vsel %vm64, %v52, 0
    %v84 = vsel %vm64, %v53, 0
    %v87 = vsel %vm64, %v54, 0
    %89 = vmatprep.subr.mxu0 0.0
    %90 = vmatpush1.msra.mxu0 %v55
    %91 = vmatprep.subr.mxu0 0.0
    %92 = vmatpush1.msra.mxu0 %v56
    %93 = vmatprep.subr.mxu0 0.0
    %94 = vmatpush1.msra.mxu0 0.0
    %95 = vmatprep.subr.mxu0 0.0
    %96 = vmatpush1.msra.mxu0 0.0
    %97 = vmatprep.subr.mxu0 0.0
    %98 = vmatpush1.msra.mxu0 0.0
    %99 = vmatprep.subr.mxu0 0.0
    %100 = vmatpush1.msra.mxu0 0.0
    %101 = vmatprep.subr.mxu0 0.0
    %102 = vmatpush1.msra.mxu0 0.0
    %103 = vmatprep.subr.mxu0 0.0
    %104 = vmatpush1.msra.mxu0 0.0
    %105 = vmatprep.subr.mxu0 0.0
    %106 = vmatpush1.msra.mxu0 0.0
    %107 = vmatprep.subr.mxu0 0.0
    %108 = vmatpush1.msra.mxu0 0.0
    %109 = vmatprep.subr.mxu0 0.0
    %110 = vmatpush1.msra.mxu0 0.0
    %111 = vmatprep.subr.mxu0 0.0
    %112 = vmatpush1.msra.mxu0 0.0
    %113 = vmatprep.subr.mxu0 0.0
    %114 = vmatpush1.msra.mxu0 0.0
    %115 = vmatprep.subr.mxu0 0.0
    %116 = vmatpush1.msra.mxu0 0.0
    %117 = vmatprep.subr.mxu0 0.0
    %118 = vmatpush1.msra.mxu0 0.0
    %119 = vmatprep.subr.mxu0 0.0
    %120 = vmatpush1.msra.mxu0 0.0
    %121 = vmatprep.subr.mxu0 0.0
    %122 = vmatpush1.msra.mxu0 0.0
    %123 = vmatprep.subr.mxu0 0.0
    %124 = vmatpush1.msra.mxu0 0.0
    %125 = vmatprep.subr.mxu0 0.0
    %126 = vmatpush1.msra.mxu0 0.0
    %127 = vmatprep.subr.mxu0 0.0
    %128 = vmatpush1.msra.mxu0 0.0
    %129 = vmatprep.subr.mxu0 0.0
    %130 = vmatpush1.msra.mxu0 0.0
    %131 = vmatprep.subr.mxu0 0.0
    %132 = vmatpush1.msra.mxu0 0.0
    %133 = vmatprep.subr.mxu0 0.0
    %134 = vmatpush1.msra.mxu0 0.0
    %135 = vmatprep.subr.mxu0 0.0
    %136 = vmatpush1.msra.mxu0 0.0
    %137 = vmatprep.subr.mxu0 0.0
    %138 = vmatpush1.msra.mxu0 0.0
    %139 = vmatprep.subr.mxu0 0.0
    %140 = vmatpush1.msra.mxu0 0.0
    %141 = vmatprep.subr.mxu0 0.0
    %142 = vmatpush1.msra.mxu0 0.0
    %143 = vmatprep.subr.mxu0 0.0
    %144 = vmatpush1.msra.mxu0 0.0
    %145 = vmatprep.subr.mxu0 0.0
    %146 = vmatpush1.msra.mxu0 0.0
    %147 = vmatprep.subr.mxu0 0.0
    %148 = vmatpush1.msra.mxu0 0.0
    %149 = vmatprep.subr.mxu0 0.0
    %150 = vmatpush1.msra.mxu0 0.0
    %151 = vmatprep.subr.mxu0 0.0
    %152 = vmatpush1.msra.mxu0 0.0
    %153 = vmatprep.mubr.f32.mxu0 0.0
    %154 = vmatmul.mubr.f32.gmra.mrb[0].mxu0 %v66
    %v155 = vpop.f32.mrb[0].mxu0
    %v156 = vadd.f32 %v62, %v155
    %v157 = vpop.f32.mrb[0].mxu0
    %158 = vmatprep.mubr.f32.mxu0 0.0
    %159 = vmatmul.mubr.f32.gmra.mrb[0].mxu0 %v69
    %v160 = vpop.f32.mrb[0].mxu0
    %v161 = vadd.f32 %v62, %v160
    %v162 = vpop.f32.mrb[0].mxu0
    %163 = vmatprep.mubr.f32.mxu0 0.0
    %164 = vmatmul.mubr.f32.gmra.mrb[0].mxu0 %v72
    %v165 = vpop.f32.mrb[0].mxu0
    %v166 = vadd.f32 %v62, %v165
    %v167 = vpop.f32.mrb[0].mxu0
    %168 = vmatprep.mubr.f32.mxu0 0.0
    %169 = vmatmul.mubr.f32.gmra.mrb[0].mxu0 %v75
    %v170 = vpop.f32.mrb[0].mxu0
    %v171 = vadd.f32 %v62, %v170
    %v172 = vpop.f32.mrb[0].mxu0
    %173 = vmatprep.mubr.f32.mxu0 0.0
    %174 = vmatmul.mubr.f32.gmra.mrb[0].mxu0 %v78
    %v175 = vpop.f32.mrb[0].mxu0
    %v176 = vadd.f32 %v62, %v175
    %v177 = vpop.f32.mrb[0].mxu0
    %178 = vmatprep.mubr.f32.mxu0 0.0
    %179 = vmatmul.mubr.f32.gmra.mrb[0].mxu0 %v81
    %v180 = vpop.f32.mrb[0].mxu0
    %v181 = vadd.f32 %v62, %v180
    %v182 = vpop.f32.mrb[0].mxu0
    %183 = vmatprep.mubr.f32.mxu0 0.0
    %184 = vmatmul.mubr.f32.gmra.mrb[0].mxu0 %v84
    %v185 = vpop.f32.mrb[0].mxu0
    %v186 = vadd.f32 %v62, %v185
    %v187 = vpop.f32.mrb[0].mxu0
    %188 = vmatprep.mubr.f32.mxu0 0.0
    %189 = vmatmul.mubr.f32.gmra.mrb[0].mxu0 %v87
    %v190 = vpop.f32.mrb[0].mxu0
    %v191 = vadd.f32 %v62, %v190
    %v192 = vpop.f32.mrb[0].mxu0
    %193 = vdwg.mxu0
    %194 = vst [vmem:[#allocation2] sm:$0xff] %v156
    %195 = vst [vmem:[#allocation2 + $0x8] sm:$0xff] %v161
    %196 = vst [vmem:[#allocation2 + $0x10] sm:$0xff] %v166
    %197 = vst [vmem:[#allocation2 + $0x18] sm:$0xff] %v171
    %198 = vst [vmem:[#allocation2 + $0x20] sm:$0xff] %v176
    %199 = vst [vmem:[#allocation2 + $0x28] sm:$0xff] %v181
    %200 = vst [vmem:[#allocation2 + $0x30] sm:$0xff] %v186
    %201 = vst [vmem:[#allocation2 + $0x38] sm:$0xff] %v191
    %v202 = vld [vmem:[%s2] sm:$0xff]
    %v203 = vld [vmem:[%s2 + $0x8] sm:$0xff]
    %v204 = vld [vmem:[%s2 + $0x10] sm:$0xff]
    %v205 = vld [vmem:[%s2 + $0x18] sm:$0xff]
    %v206 = vld [vmem:[#allocation2] sm:$0xff]
    %vm207 = vcmask 261120
    %v209 = vsel %vm207, 0.0, 0
    %211 = vmatprep.subr.mxu0 0.0
    %212 = vmatpush1.msra.mxu0 %v202
    %213 = vmatprep.subr.mxu0 0.0
    %214 = vmatpush1.msra.mxu0 %v203
    %215 = vmatprep.subr.mxu0 0.0
    %216 = vmatpush1.msra.mxu0 %v204
    %217 = vmatprep.subr.mxu0 0.0
    %218 = vmatpush1.msra.mxu0 %v205
    %219 = vmatprep.subr.mxu0 0.0
    %220 = vmatpush1.msra.mxu0 0.0
    %221 = vmatprep.subr.mxu0 0.0
    %222 = vmatpush1.msra.mxu0 0.0
    %223 = vmatprep.subr.mxu0 0.0
    %224 = vmatpush1.msra.mxu0 0.0
    %225 = vmatprep.subr.mxu0 0.0
    %226 = vmatpush1.msra.mxu0 0.0
    %227 = vmatprep.subr.mxu0 0.0
    %228 = vmatpush1.msra.mxu0 0.0
    %229 = vmatprep.subr.mxu0 0.0
    %230 = vmatpush1.msra.mxu0 0.0
    %231 = vmatprep.subr.mxu0 0.0
    %232 = vmatpush1.msra.mxu0 0.0
    %233 = vmatprep.subr.mxu0 0.0
    %234 = vmatpush1.msra.mxu0 0.0
    %235 = vmatprep.subr.mxu0 0.0
    %236 = vmatpush1.msra.mxu0 0.0
    %237 = vmatprep.subr.mxu0 0.0
    %238 = vmatpush1.msra.mxu0 0.0
    %239 = vmatprep.subr.mxu0 0.0
    %240 = vmatpush1.msra.mxu0 0.0
    %241 = vmatprep.subr.mxu0 0.0
    %242 = vmatpush1.msra.mxu0 0.0
    %243 = vmatprep.subr.mxu0 0.0
    %244 = vmatpush1.msra.mxu0 0.0
    %245 = vmatprep.subr.mxu0 0.0
    %246 = vmatpush1.msra.mxu0 0.0
    %247 = vmatprep.subr.mxu0 0.0
    %248 = vmatpush1.msra.mxu0 0.0
    %249 = vmatprep.subr.mxu0 0.0
    %250 = vmatpush1.msra.mxu0 0.0
    %251 = vmatprep.subr.mxu0 0.0
    %252 = vmatpush1.msra.mxu0 0.0
    %253 = vmatprep.subr.mxu0 0.0
    %254 = vmatpush1.msra.mxu0 0.0
    %255 = vmatprep.subr.mxu0 0.0
    %256 = vmatpush1.msra.mxu0 0.0
    %257 = vmatprep.subr.mxu0 0.0
    %258 = vmatpush1.msra.mxu0 0.0
    %259 = vmatprep.subr.mxu0 0.0
    %260 = vmatpush1.msra.mxu0 0.0
    %261 = vmatprep.subr.mxu0 0.0
    %262 = vmatpush1.msra.mxu0 0.0
    %263 = vmatprep.subr.mxu0 0.0
    %264 = vmatpush1.msra.mxu0 0.0
    %265 = vmatprep.subr.mxu0 0.0
    %266 = vmatpush1.msra.mxu0 0.0
    %267 = vmatprep.subr.mxu0 0.0
    %268 = vmatpush1.msra.mxu0 0.0
    %269 = vmatprep.subr.mxu0 0.0
    %270 = vmatpush1.msra.mxu0 0.0
    %271 = vmatprep.subr.mxu0 0.0
    %272 = vmatpush1.msra.mxu0 0.0
    %273 = vmatprep.subr.mxu0 0.0
    %274 = vmatpush1.msra.mxu0 0.0
    %275 = vmatprep.mubr.f32.mxu0 0.0
    %276 = vmatmul.mubr.f32.gmra.mrb[0].mxu0 %v209
    %v277 = vpop.f32.mrb[0].mxu0
    %v278 = vadd.f32 0.0, %v277
    %v279 = vpop.f32.mrb[0].mxu0
    %280 = vdwg.mxu0
    %v281 = vadd.f32 %v206, %v278
    %v282 = vxor.u32 %v281, 2147483648
    %v283 = vmul.f32 %v282, 1.442695
    %v284 = vpow.pop %v283
    %v285 = vadd.f32 %v284, 1.0
    %v286 = vrcp.pop %v285
    %v287 = vmul.f32 1.0, %v286
    %v288 = vtanh.pop %v281
    %v289 = vmul.f32 %v287, 0.0
    %291 = vrot.lane.b32.xlu0 %v288, 64
    %v292 = vpop.permute.xlu0 %291
    %v294 = vmul.f32 %v287, %v292
    %296 = vrot.lane.b32.xlu0 %v294, 32
    %v297 = vpop.permute.xlu0 %296
    %v299 = vadd.f32 %v289, %v297
    %v300 = vtanh.pop %v299
    %302 = vrot.lane.b32.xlu0 %v300, 64
    %v303 = vpop.permute.xlu0 %302
    %v305 = vmul.f32 %v287, %v303
    %s306 = scalar_lea.vmem [#allocation2], 8
    %v307 = vld [vmem:[%s306] sm:$0xff]
    %309 = vrot.lane.b32.xlu0 %v305, 32
    %v310 = vpop.permute.xlu0 %309
    %v311 = vsel %vm207, %v310, 0
    %313 = vmatprep.subr.mxu0 0.0
    %314 = vmatpush1.msra.mxu0 %v202
    %315 = vmatprep.subr.mxu0 0.0
    %316 = vmatpush1.msra.mxu0 %v203
    %317 = vmatprep.subr.mxu0 0.0
    %318 = vmatpush1.msra.mxu0 %v204
    %319 = vmatprep.subr.mxu0 0.0
    %320 = vmatpush1.msra.mxu0 %v205
    %321 = vmatprep.subr.mxu0 0.0
    %322 = vmatpush1.msra.mxu0 0.0
    %323 = vmatprep.subr.mxu0 0.0
    %324 = vmatpush1.msra.mxu0 0.0
    %325 = vmatprep.subr.mxu0 0.0
    %326 = vmatpush1.msra.mxu0 0.0
    %327 = vmatprep.subr.mxu0 0.0
    %328 = vmatpush1.msra.mxu0 0.0
    %329 = vmatprep.subr.mxu0 0.0
    %330 = vmatpush1.msra.mxu0 0.0
    %331 = vmatprep.subr.mxu0 0.0
    %332 = vmatpush1.msra.mxu0 0.0
    %333 = vmatprep.subr.mxu0 0.0
    %334 = vmatpush1.msra.mxu0 0.0
    %335 = vmatprep.subr.mxu0 0.0
    %336 = vmatpush1.msra.mxu0 0.0
    %337 = vmatprep.subr.mxu0 0.0
    %338 = vmatpush1.msra.mxu0 0.0
    %339 = vmatprep.subr.mxu0 0.0
    %340 = vmatpush1.msra.mxu0 0.0
    %341 = vmatprep.subr.mxu0 0.0
    %342 = vmatpush1.msra.mxu0 0.0
    %343 = vmatprep.subr.mxu0 0.0
    %344 = vmatpush1.msra.mxu0 0.0
    %345 = vmatprep.subr.mxu0 0.0
    %346 = vmatpush1.msra.mxu0 0.0
    %347 = vmatprep.subr.mxu0 0.0
    %348 = vmatpush1.msra.mxu0 0.0
    %349 = vmatprep.subr.mxu0 0.0
    %350 = vmatpush1.msra.mxu0 0.0
    %351 = vmatprep.subr.mxu0 0.0
    %352 = vmatpush1.msra.mxu0 0.0
    %353 = vmatprep.subr.mxu0 0.0
    %354 = vmatpush1.msra.mxu0 0.0
    %355 = vmatprep.subr.mxu0 0.0
    %356 = vmatpush1.msra.mxu0 0.0
    %357 = vmatprep.subr.mxu0 0.0
    %358 = vmatpush1.msra.mxu0 0.0
    %359 = vmatprep.subr.mxu0 0.0
    %360 = vmatpush1.msra.mxu0 0.0
    %361 = vmatprep.subr.mxu0 0.0
    %362 = vmatpush1.msra.mxu0 0.0
    %363 = vmatprep.subr.mxu0 0.0
    %364 = vmatpush1.msra.mxu0 0.0
    %365 = vmatprep.subr.mxu0 0.0
    %366 = vmatpush1.msra.mxu0 0.0
    %367 = vmatprep.subr.mxu0 0.0
    %368 = vmatpush1.msra.mxu0 0.0
    %369 = vmatprep.subr.mxu0 0.0
    %370 = vmatpush1.msra.mxu0 0.0
    %371 = vmatprep.subr.mxu0 0.0
    %372 = vmatpush1.msra.mxu0 0.0
    %373 = vmatprep.subr.mxu0 0.0
    %374 = vmatpush1.msra.mxu0 0.0
    %375 = vmatprep.subr.mxu0 0.0
    %376 = vmatpush1.msra.mxu0 0.0
    %377 = vmatprep.mubr.f32.mxu0 0.0
    %378 = vmatmul.mubr.f32.gmra.mrb[0].mxu0 %v311
    %v379 = vpop.f32.mrb[0].mxu0
    %v380 = vadd.f32 0.0, %v379
    %v381 = vpop.f32.mrb[0].mxu0
    %382 = vdwg.mxu0
    %v383 = vadd.f32 %v307, %v380
    %v384 = vxor.u32 %v383, 2147483648
    %v385 = vmul.f32 %v384, 1.442695
    %v386 = vpow.pop %v385
    %v387 = vadd.f32 %v386, 1.0
    %v388 = vrcp.pop %v387
    %v389 = vmul.f32 1.0, %v388
    %v390 = vtanh.pop %v383
    %v391 = vmul.f32 %v389, %v299
    %393 = vrot.lane.b32.xlu0 %v390, 64
    %v394 = vpop.permute.xlu0 %393
    %v396 = vmul.f32 %v389, %v394
    %398 = vrot.lane.b32.xlu0 %v396, 32
    %v399 = vpop.permute.xlu0 %398
    %v401 = vadd.f32 %v391, %v399
    %v402 = vtanh.pop %v401
    %404 = vrot.lane.b32.xlu0 %v402, 64
    %v405 = vpop.permute.xlu0 %404
    %v407 = vmul.f32 %v389, %v405
    %s408 = scalar_lea.vmem [#allocation2], 16
    %v409 = vld [vmem:[%s408] sm:$0xff]
    %411 = vrot.lane.b32.xlu0 %v407, 32
    %v412 = vpop.permute.xlu0 %411
    %v413 = vsel %vm207, %v412, 0
    %415 = vmatprep.subr.mxu0 0.0
    %416 = vmatpush1.msra.mxu0 %v202
    %417 = vmatprep.subr.mxu0 0.0
    %418 = vmatpush1.msra.mxu0 %v203
    %419 = vmatprep.subr.mxu0 0.0
    %420 = vmatpush1.msra.mxu0 %v204
    %421 = vmatprep.subr.mxu0 0.0
    %422 = vmatpush1.msra.mxu0 %v205
    %423 = vmatprep.subr.mxu0 0.0
    %424 = vmatpush1.msra.mxu0 0.0
    %425 = vmatprep.subr.mxu0 0.0
    %426 = vmatpush1.msra.mxu0 0.0
    %427 = vmatprep.subr.mxu0 0.0
    %428 = vmatpush1.msra.mxu0 0.0
    %429 = vmatprep.subr.mxu0 0.0
    %430 = vmatpush1.msra.mxu0 0.0
    %431 = vmatprep.subr.mxu0 0.0
    %432 = vmatpush1.msra.mxu0 0.0
    %433 = vmatprep.subr.mxu0 0.0
    %434 = vmatpush1.msra.mxu0 0.0
    %435 = vmatprep.subr.mxu0 0.0
    %436 = vmatpush1.msra.mxu0 0.0
    %437 = vmatprep.subr.mxu0 0.0
    %438 = vmatpush1.msra.mxu0 0.0
    %439 = vmatprep.subr.mxu0 0.0
    %440 = vmatpush1.msra.mxu0 0.0
    %441 = vmatprep.subr.mxu0 0.0
    %442 = vmatpush1.msra.mxu0 0.0
    %443 = vmatprep.subr.mxu0 0.0
    %444 = vmatpush1.msra.mxu0 0.0
    %445 = vmatprep.subr.mxu0 0.0
    %446 = vmatpush1.msra.mxu0 0.0
    %447 = vmatprep.subr.mxu0 0.0
    %448 = vmatpush1.msra.mxu0 0.0
    %449 = vmatprep.subr.mxu0 0.0
    %450 = vmatpush1.msra.mxu0 0.0
    %451 = vmatprep.subr.mxu0 0.0
    %452 = vmatpush1.msra.mxu0 0.0
    %453 = vmatprep.subr.mxu0 0.0
    %454 = vmatpush1.msra.mxu0 0.0
    %455 = vmatprep.subr.mxu0 0.0
    %456 = vmatpush1.msra.mxu0 0.0
    %457 = vmatprep.subr.mxu0 0.0
    %458 = vmatpush1.msra.mxu0 0.0
    %459 = vmatprep.subr.mxu0 0.0
    %460 = vmatpush1.msra.mxu0 0.0
    %461 = vmatprep.subr.mxu0 0.0
    %462 = vmatpush1.msra.mxu0 0.0
    %463 = vmatprep.subr.mxu0 0.0
    %464 = vmatpush1.msra.mxu0 0.0
    %465 = vmatprep.subr.mxu0 0.0
    %466 = vmatpush1.msra.mxu0 0.0
    %467 = vmatprep.subr.mxu0 0.0
    %468 = vmatpush1.msra.mxu0 0.0
    %469 = vmatprep.subr.mxu0 0.0
    %470 = vmatpush1.msra.mxu0 0.0
    %471 = vmatprep.subr.mxu0 0.0
    %472 = vmatpush1.msra.mxu0 0.0
    %473 = vmatprep.subr.mxu0 0.0
    %474 = vmatpush1.msra.mxu0 0.0
    %475 = vmatprep.subr.mxu0 0.0
    %476 = vmatpush1.msra.mxu0 0.0
    %477 = vmatprep.subr.mxu0 0.0
    %478 = vmatpush1.msra.mxu0 0.0
    %479 = vmatprep.mubr.f32.mxu0 0.0
    %480 = vmatmul.mubr.f32.gmra.mrb[0].mxu0 %v413
    %v481 = vpop.f32.mrb[0].mxu0
    %v482 = vadd.f32 0.0, %v481
    %v483 = vpop.f32.mrb[0].mxu0
    %484 = vdwg.mxu0
    %v485 = vadd.f32 %v409, %v482
    %v486 = vxor.u32 %v485, 2147483648
    %v487 = vmul.f32 %v486, 1.442695
    %v488 = vpow.pop %v487
    %v489 = vadd.f32 %v488, 1.0
    %v490 = vrcp.pop %v489
    %v491 = vmul.f32 1.0, %v490
    %v492 = vtanh.pop %v485
    %v493 = vmul.f32 %v491, %v401
    %495 = vrot.lane.b32.xlu0 %v492, 64
    %v496 = vpop.permute.xlu0 %495
    %v498 = vmul.f32 %v491, %v496
    %500 = vrot.lane.b32.xlu0 %v498, 32
    %v501 = vpop.permute.xlu0 %500
    %v503 = vadd.f32 %v493, %v501
    %v504 = vtanh.pop %v503
    %506 = vrot.lane.b32.xlu0 %v504, 64
    %v507 = vpop.permute.xlu0 %506
    %v509 = vmul.f32 %v491, %v507
    %s510 = scalar_lea.vmem [#allocation2], 24
    %v511 = vld [vmem:[%s510] sm:$0xff]
    %513 = vrot.lane.b32.xlu0 %v509, 32
    %v514 = vpop.permute.xlu0 %513
    %v515 = vsel %vm207, %v514, 0
    %517 = vmatprep.subr.mxu0 0.0
    %518 = vmatpush1.msra.mxu0 %v202
    %519 = vmatprep.subr.mxu0 0.0
    %520 = vmatpush1.msra.mxu0 %v203
    %521 = vmatprep.subr.mxu0 0.0
    %522 = vmatpush1.msra.mxu0 %v204
    %523 = vmatprep.subr.mxu0 0.0
    %524 = vmatpush1.msra.mxu0 %v205
    %525 = vmatprep.subr.mxu0 0.0
    %526 = vmatpush1.msra.mxu0 0.0
    %527 = vmatprep.subr.mxu0 0.0
    %528 = vmatpush1.msra.mxu0 0.0
    %529 = vmatprep.subr.mxu0 0.0
    %530 = vmatpush1.msra.mxu0 0.0
    %531 = vmatprep.subr.mxu0 0.0
    %532 = vmatpush1.msra.mxu0 0.0
    %533 = vmatprep.subr.mxu0 0.0
    %534 = vmatpush1.msra.mxu0 0.0
    %535 = vmatprep.subr.mxu0 0.0
    %536 = vmatpush1.msra.mxu0 0.0
    %537 = vmatprep.subr.mxu0 0.0
    %538 = vmatpush1.msra.mxu0 0.0
    %539 = vmatprep.subr.mxu0 0.0
    %540 = vmatpush1.msra.mxu0 0.0
    %541 = vmatprep.subr.mxu0 0.0
    %542 = vmatpush1.msra.mxu0 0.0
    %543 = vmatprep.subr.mxu0 0.0
    %544 = vmatpush1.msra.mxu0 0.0
    %545 = vmatprep.subr.mxu0 0.0
    %546 = vmatpush1.msra.mxu0 0.0
    %547 = vmatprep.subr.mxu0 0.0
    %548 = vmatpush1.msra.mxu0 0.0
    %549 = vmatprep.subr.mxu0 0.0
    %550 = vmatpush1.msra.mxu0 0.0
    %551 = vmatprep.subr.mxu0 0.0
    %552 = vmatpush1.msra.mxu0 0.0
    %553 = vmatprep.subr.mxu0 0.0
    %554 = vmatpush1.msra.mxu0 0.0
    %555 = vmatprep.subr.mxu0 0.0
    %556 = vmatpush1.msra.mxu0 0.0
    %557 = vmatprep.subr.mxu0 0.0
    %558 = vmatpush1.msra.mxu0 0.0
    %559 = vmatprep.subr.mxu0 0.0
    %560 = vmatpush1.msra.mxu0 0.0
    %561 = vmatprep.subr.mxu0 0.0
    %562 = vmatpush1.msra.mxu0 0.0
    %563 = vmatprep.subr.mxu0 0.0
    %564 = vmatpush1.msra.mxu0 0.0
    %565 = vmatprep.subr.mxu0 0.0
    %566 = vmatpush1.msra.mxu0 0.0
    %567 = vmatprep.subr.mxu0 0.0
    %568 = vmatpush1.msra.mxu0 0.0
    %569 = vmatprep.subr.mxu0 0.0
    %570 = vmatpush1.msra.mxu0 0.0
    %571 = vmatprep.subr.mxu0 0.0
    %572 = vmatpush1.msra.mxu0 0.0
    %573 = vmatprep.subr.mxu0 0.0
    %574 = vmatpush1.msra.mxu0 0.0
    %575 = vmatprep.subr.mxu0 0.0
    %576 = vmatpush1.msra.mxu0 0.0
    %577 = vmatprep.subr.mxu0 0.0
    %578 = vmatpush1.msra.mxu0 0.0
    %579 = vmatprep.subr.mxu0 0.0
    %580 = vmatpush1.msra.mxu0 0.0
    %581 = vmatprep.mubr.f32.mxu0 0.0
    %582 = vmatmul.mubr.f32.gmra.mrb[0].mxu0 %v515
    %v583 = vpop.f32.mrb[0].mxu0
    %v584 = vadd.f32 0.0, %v583
    %v585 = vpop.f32.mrb[0].mxu0
    %586 = vdwg.mxu0
    %v587 = vadd.f32 %v511, %v584
    %v588 = vxor.u32 %v587, 2147483648
    %v589 = vmul.f32 %v588, 1.442695
    %v590 = vpow.pop %v589
    %v591 = vadd.f32 %v590, 1.0
    %v592 = vrcp.pop %v591
    %v593 = vmul.f32 1.0, %v592
    %v594 = vtanh.pop %v587
    %v595 = vmul.f32 %v593, %v503
    %597 = vrot.lane.b32.xlu0 %v594, 64
    %v598 = vpop.permute.xlu0 %597
    %v600 = vmul.f32 %v593, %v598
    %602 = vrot.lane.b32.xlu0 %v600, 32
    %v603 = vpop.permute.xlu0 %602
    %v605 = vadd.f32 %v595, %v603
    %v606 = vtanh.pop %v605
    %608 = vrot.lane.b32.xlu0 %v606, 64
    %v609 = vpop.permute.xlu0 %608
    %v611 = vmul.f32 %v593, %v609
    %s612 = scalar_lea.vmem [#allocation2], 32
    %v613 = vld [vmem:[%s612] sm:$0xff]
    %615 = vrot.lane.b32.xlu0 %v611, 32
    %v616 = vpop.permute.xlu0 %615
    %v617 = vsel %vm207, %v616, 0
    %619 = vmatprep.subr.mxu0 0.0
    %620 = vmatpush1.msra.mxu0 %v202
    %621 = vmatprep.subr.mxu0 0.0
    %622 = vmatpush1.msra.mxu0 %v203
    %623 = vmatprep.subr.mxu0 0.0
    %624 = vmatpush1.msra.mxu0 %v204
    %625 = vmatprep.subr.mxu0 0.0
    %626 = vmatpush1.msra.mxu0 %v205
    %627 = vmatprep.subr.mxu0 0.0
    %628 = vmatpush1.msra.mxu0 0.0
    %629 = vmatprep.subr.mxu0 0.0
    %630 = vmatpush1.msra.mxu0 0.0
    %631 = vmatprep.subr.mxu0 0.0
    %632 = vmatpush1.msra.mxu0 0.0
    %633 = vmatprep.subr.mxu0 0.0
    %634 = vmatpush1.msra.mxu0 0.0
    %635 = vmatprep.subr.mxu0 0.0
    %636 = vmatpush1.msra.mxu0 0.0
    %637 = vmatprep.subr.mxu0 0.0
    %638 = vmatpush1.msra.mxu0 0.0
    %639 = vmatprep.subr.mxu0 0.0
    %640 = vmatpush1.msra.mxu0 0.0
    %641 = vmatprep.subr.mxu0 0.0
    %642 = vmatpush1.msra.mxu0 0.0
    %643 = vmatprep.subr.mxu0 0.0
    %644 = vmatpush1.msra.mxu0 0.0
    %645 = vmatprep.subr.mxu0 0.0
    %646 = vmatpush1.msra.mxu0 0.0
    %647 = vmatprep.subr.mxu0 0.0
    %648 = vmatpush1.msra.mxu0 0.0
    %649 = vmatprep.subr.mxu0 0.0
    %650 = vmatpush1.msra.mxu0 0.0
    %651 = vmatprep.subr.mxu0 0.0
    %652 = vmatpush1.msra.mxu0 0.0
    %653 = vmatprep.subr.mxu0 0.0
    %654 = vmatpush1.msra.mxu0 0.0
    %655 = vmatprep.subr.mxu0 0.0
    %656 = vmatpush1.msra.mxu0 0.0
    %657 = vmatprep.subr.mxu0 0.0
    %658 = vmatpush1.msra.mxu0 0.0
    %659 = vmatprep.subr.mxu0 0.0
    %660 = vmatpush1.msra.mxu0 0.0
    %661 = vmatprep.subr.mxu0 0.0
    %662 = vmatpush1.msra.mxu0 0.0
    %663 = vmatprep.subr.mxu0 0.0
    %664 = vmatpush1.msra.mxu0 0.0
    %665 = vmatprep.subr.mxu0 0.0
    %666 = vmatpush1.msra.mxu0 0.0
    %667 = vmatprep.subr.mxu0 0.0
    %668 = vmatpush1.msra.mxu0 0.0
    %669 = vmatprep.subr.mxu0 0.0
    %670 = vmatpush1.msra.mxu0 0.0
    %671 = vmatprep.subr.mxu0 0.0
    %672 = vmatpush1.msra.mxu0 0.0
    %673 = vmatprep.subr.mxu0 0.0
    %674 = vmatpush1.msra.mxu0 0.0
    %675 = vmatprep.subr.mxu0 0.0
    %676 = vmatpush1.msra.mxu0 0.0
    %677 = vmatprep.subr.mxu0 0.0
    %678 = vmatpush1.msra.mxu0 0.0
    %679 = vmatprep.subr.mxu0 0.0
    %680 = vmatpush1.msra.mxu0 0.0
    %681 = vmatprep.subr.mxu0 0.0
    %682 = vmatpush1.msra.mxu0 0.0
    %683 = vmatprep.mubr.f32.mxu0 0.0
    %684 = vmatmul.mubr.f32.gmra.mrb[0].mxu0 %v617
    %v685 = vpop.f32.mrb[0].mxu0
    %v686 = vadd.f32 0.0, %v685
    %v687 = vpop.f32.mrb[0].mxu0
    %688 = vdwg.mxu0
    %v689 = vadd.f32 %v613, %v686
    %v690 = vxor.u32 %v689, 2147483648
    %v691 = vmul.f32 %v690, 1.442695
    %v692 = vpow.pop %v691
    %v693 = vadd.f32 %v692, 1.0
    %v694 = vrcp.pop %v693
    %v695 = vmul.f32 1.0, %v694
    %v696 = vtanh.pop %v689
    %v697 = vmul.f32 %v695, %v605
    %699 = vrot.lane.b32.xlu0 %v696, 64
    %v700 = vpop.permute.xlu0 %699
    %v702 = vmul.f32 %v695, %v700
    %704 = vrot.lane.b32.xlu0 %v702, 32
    %v705 = vpop.permute.xlu0 %704
    %v707 = vadd.f32 %v697, %v705
    %v708 = vtanh.pop %v707
    %710 = vrot.lane.b32.xlu0 %v708, 64
    %v711 = vpop.permute.xlu0 %710
    %v713 = vmul.f32 %v695, %v711
    %s714 = scalar_lea.vmem [#allocation2], 40
    %v715 = vld [vmem:[%s714] sm:$0xff]
    %717 = vrot.lane.b32.xlu0 %v713, 32
    %v718 = vpop.permute.xlu0 %717
    %v719 = vsel %vm207, %v718, 0
    %721 = vmatprep.subr.mxu0 0.0
    %722 = vmatpush1.msra.mxu0 %v202
    %723 = vmatprep.subr.mxu0 0.0
    %724 = vmatpush1.msra.mxu0 %v203
    %725 = vmatprep.subr.mxu0 0.0
    %726 = vmatpush1.msra.mxu0 %v204
    %727 = vmatprep.subr.mxu0 0.0
    %728 = vmatpush1.msra.mxu0 %v205
    %729 = vmatprep.subr.mxu0 0.0
    %730 = vmatpush1.msra.mxu0 0.0
    %731 = vmatprep.subr.mxu0 0.0
    %732 = vmatpush1.msra.mxu0 0.0
    %733 = vmatprep.subr.mxu0 0.0
    %734 = vmatpush1.msra.mxu0 0.0
    %735 = vmatprep.subr.mxu0 0.0
    %736 = vmatpush1.msra.mxu0 0.0
    %737 = vmatprep.subr.mxu0 0.0
    %738 = vmatpush1.msra.mxu0 0.0
    %739 = vmatprep.subr.mxu0 0.0
    %740 = vmatpush1.msra.mxu0 0.0
    %741 = vmatprep.subr.mxu0 0.0
    %742 = vmatpush1.msra.mxu0 0.0
    %743 = vmatprep.subr.mxu0 0.0
    %744 = vmatpush1.msra.mxu0 0.0
    %745 = vmatprep.subr.mxu0 0.0
    %746 = vmatpush1.msra.mxu0 0.0
    %747 = vmatprep.subr.mxu0 0.0
    %748 = vmatpush1.msra.mxu0 0.0
    %749 = vmatprep.subr.mxu0 0.0
    %750 = vmatpush1.msra.mxu0 0.0
    %751 = vmatprep.subr.mxu0 0.0
    %752 = vmatpush1.msra.mxu0 0.0
    %753 = vmatprep.subr.mxu0 0.0
    %754 = vmatpush1.msra.mxu0 0.0
    %755 = vmatprep.subr.mxu0 0.0
    %756 = vmatpush1.msra.mxu0 0.0
    %757 = vmatprep.subr.mxu0 0.0
    %758 = vmatpush1.msra.mxu0 0.0
    %759 = vmatprep.subr.mxu0 0.0
    %760 = vmatpush1.msra.mxu0 0.0
    %761 = vmatprep.subr.mxu0 0.0
    %762 = vmatpush1.msra.mxu0 0.0
    %763 = vmatprep.subr.mxu0 0.0
    %764 = vmatpush1.msra.mxu0 0.0
    %765 = vmatprep.subr.mxu0 0.0
    %766 = vmatpush1.msra.mxu0 0.0
    %767 = vmatprep.subr.mxu0 0.0
    %768 = vmatpush1.msra.mxu0 0.0
    %769 = vmatprep.subr.mxu0 0.0
    %770 = vmatpush1.msra.mxu0 0.0
    %771 = vmatprep.subr.mxu0 0.0
    %772 = vmatpush1.msra.mxu0 0.0
    %773 = vmatprep.subr.mxu0 0.0
    %774 = vmatpush1.msra.mxu0 0.0
    %775 = vmatprep.subr.mxu0 0.0
    %776 = vmatpush1.msra.mxu0 0.0
    %777 = vmatprep.subr.mxu0 0.0
    %778 = vmatpush1.msra.mxu0 0.0
    %779 = vmatprep.subr.mxu0 0.0
    %780 = vmatpush1.msra.mxu0 0.0
    %781 = vmatprep.subr.mxu0 0.0
    %782 = vmatpush1.msra.mxu0 0.0
    %783 = vmatprep.subr.mxu0 0.0
    %784 = vmatpush1.msra.mxu0 0.0
    %785 = vmatprep.mubr.f32.mxu0 0.0
    %786 = vmatmul.mubr.f32.gmra.mrb[0].mxu0 %v719
    %v787 = vpop.f32.mrb[0].mxu0
    %v788 = vadd.f32 0.0, %v787
    %v789 = vpop.f32.mrb[0].mxu0
    %790 = vdwg.mxu0
    %v791 = vadd.f32 %v715, %v788
    %v792 = vxor.u32 %v791, 2147483648
    %v793 = vmul.f32 %v792, 1.442695
    %v794 = vpow.pop %v793
    %v795 = vadd.f32 %v794, 1.0
    %v796 = vrcp.pop %v795
    %v797 = vmul.f32 1.0, %v796
    %v798 = vtanh.pop %v791
    %v799 = vmul.f32 %v797, %v707
    %801 = vrot.lane.b32.xlu0 %v798, 64
    %v802 = vpop.permute.xlu0 %801
    %v804 = vmul.f32 %v797, %v802
    %806 = vrot.lane.b32.xlu0 %v804, 32
    %v807 = vpop.permute.xlu0 %806
    %v809 = vadd.f32 %v799, %v807
    %v810 = vtanh.pop %v809
    %812 = vrot.lane.b32.xlu0 %v810, 64
    %v813 = vpop.permute.xlu0 %812
    %v815 = vmul.f32 %v797, %v813
    %s816 = scalar_lea.vmem [#allocation2], 48
    %v817 = vld [vmem:[%s816] sm:$0xff]
    %819 = vrot.lane.b32.xlu0 %v815, 32
    %v820 = vpop.permute.xlu0 %819
    %v821 = vsel %vm207, %v820, 0
    %823 = vmatprep.subr.mxu0 0.0
    %824 = vmatpush1.msra.mxu0 %v202
    %825 = vmatprep.subr.mxu0 0.0
    %826 = vmatpush1.msra.mxu0 %v203
    %827 = vmatprep.subr.mxu0 0.0
    %828 = vmatpush1.msra.mxu0 %v204
    %829 = vmatprep.subr.mxu0 0.0
    %830 = vmatpush1.msra.mxu0 %v205
    %831 = vmatprep.subr.mxu0 0.0
    %832 = vmatpush1.msra.mxu0 0.0
    %833 = vmatprep.subr.mxu0 0.0
    %834 = vmatpush1.msra.mxu0 0.0
    %835 = vmatprep.subr.mxu0 0.0
    %836 = vmatpush1.msra.mxu0 0.0
    %837 = vmatprep.subr.mxu0 0.0
    %838 = vmatpush1.msra.mxu0 0.0
    %839 = vmatprep.subr.mxu0 0.0
    %840 = vmatpush1.msra.mxu0 0.0
    %841 = vmatprep.subr.mxu0 0.0
    %842 = vmatpush1.msra.mxu0 0.0
    %843 = vmatprep.subr.mxu0 0.0
    %844 = vmatpush1.msra.mxu0 0.0
    %845 = vmatprep.subr.mxu0 0.0
    %846 = vmatpush1.msra.mxu0 0.0
    %847 = vmatprep.subr.mxu0 0.0
    %848 = vmatpush1.msra.mxu0 0.0
    %849 = vmatprep.subr.mxu0 0.0
    %850 = vmatpush1.msra.mxu0 0.0
    %851 = vmatprep.subr.mxu0 0.0
    %852 = vmatpush1.msra.mxu0 0.0
    %853 = vmatprep.subr.mxu0 0.0
    %854 = vmatpush1.msra.mxu0 0.0
    %855 = vmatprep.subr.mxu0 0.0
    %856 = vmatpush1.msra.mxu0 0.0
    %857 = vmatprep.subr.mxu0 0.0
    %858 = vmatpush1.msra.mxu0 0.0
    %859 = vmatprep.subr.mxu0 0.0
    %860 = vmatpush1.msra.mxu0 0.0
    %861 = vmatprep.subr.mxu0 0.0
    %862 = vmatpush1.msra.mxu0 0.0
    %863 = vmatprep.subr.mxu0 0.0
    %864 = vmatpush1.msra.mxu0 0.0
    %865 = vmatprep.subr.mxu0 0.0
    %866 = vmatpush1.msra.mxu0 0.0
    %867 = vmatprep.subr.mxu0 0.0
    %868 = vmatpush1.msra.mxu0 0.0
    %869 = vmatprep.subr.mxu0 0.0
    %870 = vmatpush1.msra.mxu0 0.0
    %871 = vmatprep.subr.mxu0 0.0
    %872 = vmatpush1.msra.mxu0 0.0
    %873 = vmatprep.subr.mxu0 0.0
    %874 = vmatpush1.msra.mxu0 0.0
    %875 = vmatprep.subr.mxu0 0.0
    %876 = vmatpush1.msra.mxu0 0.0
    %877 = vmatprep.subr.mxu0 0.0
    %878 = vmatpush1.msra.mxu0 0.0
    %879 = vmatprep.subr.mxu0 0.0
    %880 = vmatpush1.msra.mxu0 0.0
    %881 = vmatprep.subr.mxu0 0.0
    %882 = vmatpush1.msra.mxu0 0.0
    %883 = vmatprep.subr.mxu0 0.0
    %884 = vmatpush1.msra.mxu0 0.0
    %885 = vmatprep.subr.mxu0 0.0
    %886 = vmatpush1.msra.mxu0 0.0
    %887 = vmatprep.mubr.f32.mxu0 0.0
    %888 = vmatmul.mubr.f32.gmra.mrb[0].mxu0 %v821
    %v889 = vpop.f32.mrb[0].mxu0
    %v890 = vadd.f32 0.0, %v889
    %v891 = vpop.f32.mrb[0].mxu0
    %892 = vdwg.mxu0
    %v893 = vadd.f32 %v817, %v890
    %v894 = vxor.u32 %v893, 2147483648
    %v895 = vmul.f32 %v894, 1.442695
    %v896 = vpow.pop %v895
    %v897 = vadd.f32 %v896, 1.0
    %v898 = vrcp.pop %v897
    %v899 = vmul.f32 1.0, %v898
    %v900 = vtanh.pop %v893
    %v901 = vmul.f32 %v899, %v809
    %903 = vrot.lane.b32.xlu0 %v900, 64
    %v904 = vpop.permute.xlu0 %903
    %v906 = vmul.f32 %v899, %v904
    %908 = vrot.lane.b32.xlu0 %v906, 32
    %v909 = vpop.permute.xlu0 %908
    %v911 = vadd.f32 %v901, %v909
    %v912 = vtanh.pop %v911
    %914 = vrot.lane.b32.xlu0 %v912, 64
    %v915 = vpop.permute.xlu0 %914
    %v917 = vmul.f32 %v899, %v915
    %s918 = scalar_lea.vmem [#allocation2], 56
    %v919 = vld [vmem:[%s918] sm:$0xff]
    %921 = vrot.lane.b32.xlu0 %v917, 32
    %v922 = vpop.permute.xlu0 %921
    %v923 = vsel %vm207, %v922, 0
    %925 = vmatprep.subr.mxu0 0.0
    %926 = vmatpush1.msra.mxu0 %v202
    %927 = vmatprep.subr.mxu0 0.0
    %928 = vmatpush1.msra.mxu0 %v203
    %929 = vmatprep.subr.mxu0 0.0
    %930 = vmatpush1.msra.mxu0 %v204
    %931 = vmatprep.subr.mxu0 0.0
    %932 = vmatpush1.msra.mxu0 %v205
    %933 = vmatprep.subr.mxu0 0.0
    %934 = vmatpush1.msra.mxu0 0.0
    %935 = vmatprep.subr.mxu0 0.0
    %936 = vmatpush1.msra.mxu0 0.0
    %937 = vmatprep.subr.mxu0 0.0
    %938 = vmatpush1.msra.mxu0 0.0
    %939 = vmatprep.subr.mxu0 0.0
    %940 = vmatpush1.msra.mxu0 0.0
    %941 = vmatprep.subr.mxu0 0.0
    %942 = vmatpush1.msra.mxu0 0.0
    %943 = vmatprep.subr.mxu0 0.0
    %944 = vmatpush1.msra.mxu0 0.0
    %945 = vmatprep.subr.mxu0 0.0
    %946 = vmatpush1.msra.mxu0 0.0
    %947 = vmatprep.subr.mxu0 0.0
    %948 = vmatpush1.msra.mxu0 0.0
    %949 = vmatprep.subr.mxu0 0.0
    %950 = vmatpush1.msra.mxu0 0.0
    %951 = vmatprep.subr.mxu0 0.0
    %952 = vmatpush1.msra.mxu0 0.0
    %953 = vmatprep.subr.mxu0 0.0
    %954 = vmatpush1.msra.mxu0 0.0
    %955 = vmatprep.subr.mxu0 0.0
    %956 = vmatpush1.msra.mxu0 0.0
    %957 = vmatprep.subr.mxu0 0.0
    %958 = vmatpush1.msra.mxu0 0.0
    %959 = vmatprep.subr.mxu0 0.0
    %960 = vmatpush1.msra.mxu0 0.0
    %961 = vmatprep.subr.mxu0 0.0
    %962 = vmatpush1.msra.mxu0 0.0
    %963 = vmatprep.subr.mxu0 0.0
    %964 = vmatpush1.msra.mxu0 0.0
    %965 = vmatprep.subr.mxu0 0.0
    %966 = vmatpush1.msra.mxu0 0.0
    %967 = vmatprep.subr.mxu0 0.0
    %968 = vmatpush1.msra.mxu0 0.0
    %969 = vmatprep.subr.mxu0 0.0
    %970 = vmatpush1.msra.mxu0 0.0
    %971 = vmatprep.subr.mxu0 0.0
    %972 = vmatpush1.msra.mxu0 0.0
    %973 = vmatprep.subr.mxu0 0.0
    %974 = vmatpush1.msra.mxu0 0.0
    %975 = vmatprep.subr.mxu0 0.0
    %976 = vmatpush1.msra.mxu0 0.0
    %977 = vmatprep.subr.mxu0 0.0
    %978 = vmatpush1.msra.mxu0 0.0
    %979 = vmatprep.subr.mxu0 0.0
    %980 = vmatpush1.msra.mxu0 0.0
    %981 = vmatprep.subr.mxu0 0.0
    %982 = vmatpush1.msra.mxu0 0.0
    %983 = vmatprep.subr.mxu0 0.0
    %984 = vmatpush1.msra.mxu0 0.0
    %985 = vmatprep.subr.mxu0 0.0
    %986 = vmatpush1.msra.mxu0 0.0
    %987 = vmatprep.subr.mxu0 0.0
    %988 = vmatpush1.msra.mxu0 0.0
    %989 = vmatprep.mubr.f32.mxu0 0.0
    %990 = vmatmul.mubr.f32.gmra.mrb[0].mxu0 %v923
    %v991 = vpop.f32.mrb[0].mxu0
    %v992 = vadd.f32 0.0, %v991
    %v993 = vpop.f32.mrb[0].mxu0
    %994 = vdwg.mxu0
    %v995 = vadd.f32 %v919, %v992
    %v996 = vxor.u32 %v995, 2147483648
    %v997 = vmul.f32 %v996, 1.442695
    %v998 = vpow.pop %v997
    %v999 = vadd.f32 %v998, 1.0
    %v1000 = vrcp.pop %v999
    %v1001 = vmul.f32 1.0, %v1000
    %v1002 = vtanh.pop %v995
    %v1003 = vmul.f32 %v1001, %v911
    %1005 = vrot.lane.b32.xlu0 %v1002, 64
    %v1006 = vpop.permute.xlu0 %1005
    %v1008 = vmul.f32 %v1001, %v1006
    %1010 = vrot.lane.b32.xlu0 %v1008, 32
    %v1011 = vpop.permute.xlu0 %1010
    %v1013 = vadd.f32 %v1003, %v1011
    %v1014 = vtanh.pop %v1013
    %1016 = vrot.lane.b32.xlu0 %v1014, 64
    %v1017 = vpop.permute.xlu0 %1016
    %v1019 = vmul.f32 %v1001, %v1017
    %v1020 = vld [vmem:[%s4] sm:$0xff]
    %v1021 = vld [vmem:[%s4 + $0x8] sm:$0xff]
    %v1022 = vld [vmem:[%s4 + $0x10] sm:$0xff]
    %v1023 = vld [vmem:[%s4 + $0x18] sm:$0xff]
    %v1024 = vld [vmem:[%s5] sm:$0x1]
    %v1026 = vlaneseq
    %v1027 = vshrl.u32 %v1026, 7
    %v1028 = vsub.s32 0, %v1027
    %v1029 = vrot.slane %v1024, %v1028
    %1032 = vrot.lane.b32.xlu0 %v1019, 32
    %v1033 = vpop.permute.xlu0 %1032
    %v1034 = vsel %vm207, %v1033, 0
    %1036 = vmatprep.subr.mxu0 0.0
    %1037 = vmatpush1.msra.mxu0 %v1020
    %1038 = vmatprep.subr.mxu0 0.0
    %1039 = vmatpush1.msra.mxu0 %v1021
    %1040 = vmatprep.subr.mxu0 0.0
    %1041 = vmatpush1.msra.mxu0 %v1022
    %1042 = vmatprep.subr.mxu0 0.0
    %1043 = vmatpush1.msra.mxu0 %v1023
    %1044 = vmatprep.subr.mxu0 0.0
    %1045 = vmatpush1.msra.mxu0 0.0
    %1046 = vmatprep.subr.mxu0 0.0
    %1047 = vmatpush1.msra.mxu0 0.0
    %1048 = vmatprep.subr.mxu0 0.0
    %1049 = vmatpush1.msra.mxu0 0.0
    %1050 = vmatprep.subr.mxu0 0.0
    %1051 = vmatpush1.msra.mxu0 0.0
    %1052 = vmatprep.subr.mxu0 0.0
    %1053 = vmatpush1.msra.mxu0 0.0
    %1054 = vmatprep.subr.mxu0 0.0
    %1055 = vmatpush1.msra.mxu0 0.0
    %1056 = vmatprep.subr.mxu0 0.0
    %1057 = vmatpush1.msra.mxu0 0.0
    %1058 = vmatprep.subr.mxu0 0.0
    %1059 = vmatpush1.msra.mxu0 0.0
    %1060 = vmatprep.subr.mxu0 0.0
    %1061 = vmatpush1.msra.mxu0 0.0
    %1062 = vmatprep.subr.mxu0 0.0
    %1063 = vmatpush1.msra.mxu0 0.0
    %1064 = vmatprep.subr.mxu0 0.0
    %1065 = vmatpush1.msra.mxu0 0.0
    %1066 = vmatprep.subr.mxu0 0.0
    %1067 = vmatpush1.msra.mxu0 0.0
    %1068 = vmatprep.subr.mxu0 0.0
    %1069 = vmatpush1.msra.mxu0 0.0
    %1070 = vmatprep.subr.mxu0 0.0
    %1071 = vmatpush1.msra.mxu0 0.0
    %1072 = vmatprep.subr.mxu0 0.0
    %1073 = vmatpush1.msra.mxu0 0.0
    %1074 = vmatprep.subr.mxu0 0.0
    %1075 = vmatpush1.msra.mxu0 0.0
    %1076 = vmatprep.subr.mxu0 0.0
    %1077 = vmatpush1.msra.mxu0 0.0
    %1078 = vmatprep.subr.mxu0 0.0
    %1079 = vmatpush1.msra.mxu0 0.0
    %1080 = vmatprep.subr.mxu0 0.0
    %1081 = vmatpush1.msra.mxu0 0.0
    %1082 = vmatprep.subr.mxu0 0.0
    %1083 = vmatpush1.msra.mxu0 0.0
    %1084 = vmatprep.subr.mxu0 0.0
    %1085 = vmatpush1.msra.mxu0 0.0
    %1086 = vmatprep.subr.mxu0 0.0
    %1087 = vmatpush1.msra.mxu0 0.0
    %1088 = vmatprep.subr.mxu0 0.0
    %1089 = vmatpush1.msra.mxu0 0.0
    %1090 = vmatprep.subr.mxu0 0.0
    %1091 = vmatpush1.msra.mxu0 0.0
    %1092 = vmatprep.subr.mxu0 0.0
    %1093 = vmatpush1.msra.mxu0 0.0
    %1094 = vmatprep.subr.mxu0 0.0
    %1095 = vmatpush1.msra.mxu0 0.0
    %1096 = vmatprep.subr.mxu0 0.0
    %1097 = vmatpush1.msra.mxu0 0.0
    %1098 = vmatprep.subr.mxu0 0.0
    %1099 = vmatpush1.msra.mxu0 0.0
    %1100 = vmatprep.mubr.f32.mxu0 0.0
    %1101 = vmatmul.mubr.f32.gmra.mrb[0].mxu0 %v1034
    %v1102 = vpop.f32.mrb[0].mxu0
    %v1103 = vadd.f32 %v1029, %v1102
    %v1104 = vpop.f32.mrb[0].mxu0
    %1105 = vdwg.mxu0
    %v1106 = vmax.f32 %v1103, 0.0
    %1107 = vst [vmem:[#allocation7] sm:$0xff] %v1106
    %v1108 = vld [vmem:[#allocation3] sm:$0xff]
    %v1109 = vld [vmem:[#allocation3 + $0x8] sm:$0xff]
    %v1110 = vld [vmem:[#allocation3 + $0x10] sm:$0xff]
    %v1111 = vld [vmem:[#allocation3 + $0x18] sm:$0xff]
    %v1112 = vld [vmem:[#allocation3 + $0x20] sm:$0xff]
    %v1113 = vld [vmem:[#allocation3 + $0x28] sm:$0xff]
    %v1114 = vld [vmem:[#allocation3 + $0x30] sm:$0xff]
    %v1115 = vld [vmem:[#allocation3 + $0x38] sm:$0xff]
    %v1116 = vld [vmem:[#allocation3 + $0x40] sm:$0xff]
    %v1117 = vld [vmem:[#allocation3 + $0x48] sm:$0xff]
    %v1118 = vld [vmem:[#allocation3 + $0x50] sm:$0xff]
    %v1119 = vld [vmem:[#allocation3 + $0x58] sm:$0xff]
    %v1120 = vld [vmem:[#allocation3 + $0x60] sm:$0xff]
    %v1121 = vld [vmem:[#allocation3 + $0x68] sm:$0xff]
    %v1122 = vld [vmem:[#allocation3 + $0x70] sm:$0xff]
    %v1123 = vld [vmem:[#allocation3 + $0x78] sm:$0xff]
    %v1124 = vld [vmem:[%s7] sm:$0x1]
    %v1126 = vlaneseq
    %v1127 = vshrl.u32 %v1126, 7
    %v1128 = vsub.s32 0, %v1127
    %v1129 = vrot.slane %v1124, %v1128
    %1131 = vmatprep.subr.mxu0 0.0
    %1132 = vmatpush1.msra.mxu0 %v1108
    %1133 = vmatprep.subr.mxu0 0.0
    %1134 = vmatpush1.msra.mxu0 %v1109
    %1135 = vmatprep.subr.mxu0 0.0
    %1136 = vmatpush1.msra.mxu0 %v1110
    %1137 = vmatprep.subr.mxu0 0.0
    %1138 = vmatpush1.msra.mxu0 %v1111
    %1139 = vmatprep.subr.mxu0 0.0
    %1140 = vmatpush1.msra.mxu0 %v1112
    %1141 = vmatprep.subr.mxu0 0.0
    %1142 = vmatpush1.msra.mxu0 %v1113
    %1143 = vmatprep.subr.mxu0 0.0
    %1144 = vmatpush1.msra.mxu0 %v1114
    %1145 = vmatprep.subr.mxu0 0.0
    %1146 = vmatpush1.msra.mxu0 %v1115
    %1147 = vmatprep.subr.mxu0 0.0
    %1148 = vmatpush1.msra.mxu0 %v1116
    %1149 = vmatprep.subr.mxu0 0.0
    %1150 = vmatpush1.msra.mxu0 %v1117
    %1151 = vmatprep.subr.mxu0 0.0
    %1152 = vmatpush1.msra.mxu0 %v1118
    %1153 = vmatprep.subr.mxu0 0.0
    %1154 = vmatpush1.msra.mxu0 %v1119
    %1155 = vmatprep.subr.mxu0 0.0
    %1156 = vmatpush1.msra.mxu0 %v1120
    %1157 = vmatprep.subr.mxu0 0.0
    %1158 = vmatpush1.msra.mxu0 %v1121
    %1159 = vmatprep.subr.mxu0 0.0
    %1160 = vmatpush1.msra.mxu0 %v1122
    %1161 = vmatprep.subr.mxu0 0.0
    %1162 = vmatpush1.msra.mxu0 %v1123
    %1163 = vmatprep.subr.mxu0 0.0
    %1164 = vmatpush1.msra.mxu0 0.0
    %1165 = vmatprep.subr.mxu0 0.0
    %1166 = vmatpush1.msra.mxu0 0.0
    %1167 = vmatprep.subr.mxu0 0.0
    %1168 = vmatpush1.msra.mxu0 0.0
    %1169 = vmatprep.subr.mxu0 0.0
    %1170 = vmatpush1.msra.mxu0 0.0
    %1171 = vmatprep.subr.mxu0 0.0
    %1172 = vmatpush1.msra.mxu0 0.0
    %1173 = vmatprep.subr.mxu0 0.0
    %1174 = vmatpush1.msra.mxu0 0.0
    %1175 = vmatprep.subr.mxu0 0.0
    %1176 = vmatpush1.msra.mxu0 0.0
    %1177 = vmatprep.subr.mxu0 0.0
    %1178 = vmatpush1.msra.mxu0 0.0
    %1179 = vmatprep.subr.mxu0 0.0
    %1180 = vmatpush1.msra.mxu0 0.0
    %1181 = vmatprep.subr.mxu0 0.0
    %1182 = vmatpush1.msra.mxu0 0.0
    %1183 = vmatprep.subr.mxu0 0.0
    %1184 = vmatpush1.msra.mxu0 0.0
    %1185 = vmatprep.subr.mxu0 0.0
    %1186 = vmatpush1.msra.mxu0 0.0
    %1187 = vmatprep.subr.mxu0 0.0
    %1188 = vmatpush1.msra.mxu0 0.0
    %1189 = vmatprep.subr.mxu0 0.0
    %1190 = vmatpush1.msra.mxu0 0.0
    %1191 = vmatprep.subr.mxu0 0.0
    %1192 = vmatpush1.msra.mxu0 0.0
    %1193 = vmatprep.subr.mxu0 0.0
    %1194 = vmatpush1.msra.mxu0 0.0
    %1195 = vmatprep.mubr.f32.mxu0 0.0
    %1196 = vmatmul.mubr.f32.gmra.mrb[0].mxu0 %v1106
    %v1197 = vpop.f32.mrb[0].mxu0
    %v1198 = vadd.f32 %v1129, %v1197
    %v1199 = vpop.f32.mrb[0].mxu0
    %1200 = vdwg.mxu0
    %1201 = vst [vmem:[#allocation6] sm:$0xff] %v1198
    // Predicated region
    $region38: #{tpu_custom_call.1} parent=1 // pred_check
      _
    $region39: #{tpu_custom_call.1} parent=1 // pred_check_branch
      %1203 = sbr.rel (0) target = $region41
    $region40: #{tpu_custom_call.1} parent=1 // pred_region
      %s1205 = ssub.s32 128, 128
      %1206 = vsyncadd [#allocation5], %s1205
      %s1208 = sshll.u32 [#allocation6], 4
      %s1209 = int_to_ptr.vmem [resolvable:$true] %s1208
      %1211 = dma.vmem_to_hbm [thread:$0]  %s1209, 128, %s8, [#allocation5]
    $region41: #{tpu_custom_call.1} parent=1 // pred_fallthru
      _
    // Predicated region
    $region42: #{tpu_custom_call.1} parent=1 // pred_check
      _
    $region43: #{tpu_custom_call.1} parent=1 // pred_check_branch
      %1213 = sbr.rel (0) target = $region45
    $region44: #{tpu_custom_call.1} parent=1 // pred_region
      %s1215 = ssub.s32 128, 128
      %1216 = vsyncadd [#allocation8], %s1215
      %s1218 = sshll.u32 [#allocation7], 4
      %s1219 = int_to_ptr.vmem [resolvable:$true] %s1218
      %1221 = dma.vmem_to_hbm [thread:$0]  %s1219, 128, %s9, [#allocation8]
    $region45: #{tpu_custom_call.1} parent=1 // pred_fallthru
      _
    // Predicated region
    $region46: #{tpu_custom_call.1} parent=1 // pred_check
      _
    $region47: #{tpu_custom_call.1} parent=1 // pred_check_branch
      %1223 = sbr.rel (0) target = $region49
    $region48: #{tpu_custom_call.1} parent=1 // pred_region
      %1224 = dma.done [#allocation5], 128
    $region49: #{tpu_custom_call.1} parent=1 // pred_fallthru
      _
    // Predicated region
    $region50: #{tpu_custom_call.1} parent=1 // pred_check
      _
    $region51: #{tpu_custom_call.1} parent=1 // pred_check_branch
      %1226 = sbr.rel (0) target = $region53
    $region52: #{tpu_custom_call.1} parent=1 // pred_region
      %1227 = dma.done [#allocation8], 128
    $region53: #{tpu_custom_call.1} parent=1 // pred_fallthru
      _
    %1228 = vsyncpa [#allocation4], 1
    %1229 = vsyncpa [#allocation5], 1
    %1230 = vsyncpa [#allocation8], 1

</llo_original>
